<compile_context>
chip_gen: v7x
topology: tpu7x:2x2x1
jax: 0.10.0
libtpu: 0.0.40
codegen_flags: <defaults>
</compile_context>

<pallas_src>
import functools

import jax
import jax.numpy as jnp
from jax.experimental import pallas as pl
from jax.experimental.pallas import tpu as pltpu
import numpy as np


def network_kernel(x2d_ref,      # (T*Bp, human_dim) human_state, time-major rows t*Bp + b
                   robot_ref,    # (Bp, robot_dim)   robot_state (t = 0)
                   wih_ref,      # (human_dim, 4*Hp) LSTM W_ih^T, gate blocks [i,f,o,g], lane-padded
                   whh_ref,      # (Hp, 4*Hp)        LSTM W_hh^T, same layout
                   bias_ref,     # (1, 4*Hp)         b_ih + b_hh, same layout
                   w1r_ref,      # (robot_dim, 256)  MLP layer-1 (robot slice)
                   w1h_ref,      # (Hp, 256)         MLP layer-1 (hidden slice, rows >= H are 0)
                   b1_ref,       # (1, 256)
                   w2_ref,       # (256, 128)
                   b2_ref,       # (1, 128)
                   w3_ref,       # (128, Ap)         cols >= num_actions are 0
                   b3_ref,       # (1, Ap)
                   q_ref,        # (Bp, Ap)          output (lane-dense)
                   gx_sc,        # (T*Bp, 4*Hp) scratch: hoisted input projection
                   *, t_steps):
    B = robot_ref.shape[0]
    Hp = w1h_ref.shape[0]

    # (1) Hoisted input projection: one big matmul instead of T tiny ones,
    #     bias folded in. Rows are time-major: row t*B + b.
    gx_sc[...] = (jnp.dot(x2d_ref[...], wih_ref[...],
                          preferred_element_type=jnp.float32) + bias_ref[...])

    # h0 = c0 = 0 (matches torch.zeros initial states); padded lanes stay 0.
    h = jnp.zeros((B, Hp), jnp.float32)
    c = jnp.zeros((B, Hp), jnp.float32)

    # (2) Fully-unrolled recurrence: only h @ W_hh remains on the serial chain.
    for t in range(t_steps):
        gates = (gx_sc[t * B:(t + 1) * B, :]
                 + jnp.dot(h, whh_ref[...], preferred_element_type=jnp.float32))
        # Gate blocks (each Hp = 128 lanes, vreg-aligned): [i | f | o | g]
        sfo = jax.nn.sigmoid(gates[:, :3 * Hp])   # one EUP pass for i, f, o
        g_g = jnp.tanh(gates[:, 3 * Hp:])         # one EUP pass for g
        i_g = sfo[:, 0 * Hp:1 * Hp]
        f_g = sfo[:, 1 * Hp:2 * Hp]
        o_g = sfo[:, 2 * Hp:3 * Hp]
        c = f_g * c + i_g * g_g
        h = o_g * jnp.tanh(c)

    # (3) MLP on joint_state = concat([robot_state, h_n], axis=1).
    #     The concat is folded into a split first layer: x@W1^T == r@W1r + h@W1h.
    z1 = jnp.maximum(
        jnp.dot(robot_ref[...], w1r_ref[...], preferred_element_type=jnp.float32)
        + jnp.dot(h, w1h_ref[...], preferred_element_type=jnp.float32)
        + b1_ref[...], 0.0)
    z2 = jnp.maximum(
        jnp.dot(z1, w2_ref[...], preferred_element_type=jnp.float32)
        + b2_ref[...], 0.0)
    q_ref[...] = (jnp.dot(z2, w3_ref[...], preferred_element_type=jnp.float32)
                  + b3_ref[...]).astype(q_ref.dtype)


def init_params(key, robot_dim, human_dim, hidden, num_actions):
    """PyTorch-layout parameters (what nn.LSTM / nn.Linear would hold)."""
    ks = jax.random.split(key, 10)
    scale = 0.1
    return {
        "w_ih": jax.random.normal(ks[0], (4 * hidden, human_dim), jnp.float32) * scale,
        "w_hh": jax.random.normal(ks[1], (4 * hidden, hidden), jnp.float32) * scale,
        "b_ih": jax.random.normal(ks[2], (4 * hidden,), jnp.float32) * scale,
        "b_hh": jax.random.normal(ks[3], (4 * hidden,), jnp.float32) * scale,
        "w1": jax.random.normal(ks[4], (256, robot_dim + hidden), jnp.float32) * scale,
        "b1": jax.random.normal(ks[5], (256,), jnp.float32) * scale,
        "w2": jax.random.normal(ks[6], (128, 256), jnp.float32) * scale,
        "b2": jax.random.normal(ks[7], (128,), jnp.float32) * scale,
        "w3": jax.random.normal(ks[8], (num_actions, 128), jnp.float32) * scale,
        "b3": jax.random.normal(ks[9], (num_actions,), jnp.float32) * scale,
    }


def prepare_params(params, *, robot_dim, hidden):
    """One-time (outside jit) relayout of PyTorch-layout params into the
    kernel layout: transposed, gate-reordered to [i, f, o, g], each gate block
    zero-padded from `hidden` to Hp = multiple of 128 lanes, and the output
    layer zero-padded to a lane-dense Ap = multiple of 128 columns."""
    H = hidden
    Hp = ((H + 127) // 128) * 128
    order = (0, 1, 3, 2)  # torch gate order [i, f, g, o] -> kernel [i, f, o, g]

    def pad_gate_cols(w_t):  # w_t: (in_dim, 4H), transposed torch layout
        out = jnp.zeros((w_t.shape[0], 4 * Hp), jnp.float32)
        for k, src in enumerate(order):
            out = out.at[:, k * Hp:k * Hp + H].set(w_t[:, src * H:(src + 1) * H])
        return out

    wih_p = pad_gate_cols(params["w_ih"].T)                        # (human_dim, 4Hp)
    whh_p = jnp.zeros((Hp, 4 * Hp), jnp.float32)
    whh_p = whh_p.at[:H, :].set(pad_gate_cols(params["w_hh"].T))   # (Hp, 4Hp)
    bias_p = pad_gate_cols((params["b_ih"] + params["b_hh"]).reshape(1, 4 * H))

    w1 = params["w1"]                                              # (256, robot+H)
    w1r = w1[:, :robot_dim].T                                      # (robot_dim, 256)
    w1h = jnp.zeros((Hp, 256), jnp.float32).at[:H, :].set(w1[:, robot_dim:].T)

    A = params["w3"].shape[0]
    Ap = ((A + 127) // 128) * 128                                  # lane-dense output
    w3_p = jnp.zeros((128, Ap), jnp.float32).at[:, :A].set(params["w3"].T)
    b3_p = jnp.zeros((1, Ap), jnp.float32).at[:, :A].set(params["b3"].reshape(1, -1))

    return {
        "wih": wih_p, "whh": whh_p, "bias": bias_p,
        "w1r": w1r, "w1h": w1h, "b1": params["b1"].reshape(1, -1),
        "w2": params["w2"].T, "b2": params["b2"].reshape(1, -1),
        "w3": w3_p, "b3": b3_p,
    }


@functools.partial(jax.jit, static_argnames=("robot_dim", "num_actions"))
def network_forward(state, kparams, *, robot_dim, num_actions):
    B, T, _ = state.shape
    Hp = kparams["w1h"].shape[0]
    Ap = kparams["w3"].shape[1]
    Bp = ((B + 7) // 8) * 8  # pad batch to full f32 sublanes / MXU rows

    robot_state = state[:, 0, :robot_dim]                             # (B, robot_dim)
    human_state = jnp.transpose(state[:, :, robot_dim:], (1, 0, 2))   # (T, B, human_dim)
    if Bp != B:
        robot_state = jnp.pad(robot_state, ((0, Bp - B), (0, 0)))
        human_state = jnp.pad(human_state, ((0, 0), (0, Bp - B), (0, 0)))
    human2d = human_state.reshape(T * Bp, -1)                         # time-major rows

    vmem = pl.BlockSpec(memory_space=pltpu.MemorySpace.VMEM)
    q = pl.pallas_call(
        functools.partial(network_kernel, t_steps=T),
        out_shape=jax.ShapeDtypeStruct((Bp, Ap), jnp.float32),
        in_specs=[vmem] * 12,
        out_specs=vmem,
        scratch_shapes=[pltpu.VMEM((T * Bp, 4 * Hp), jnp.float32)],
    )(human2d, robot_state, kparams["wih"], kparams["whh"], kparams["bias"],
      kparams["w1r"], kparams["w1h"], kparams["b1"],
      kparams["w2"], kparams["b2"], kparams["w3"], kparams["b3"])
    return q[:B, :num_actions]


def network_reference(state, params, *, robot_dim, hidden):
    """Pure-JAX reference mirroring the PyTorch forward, for verification."""
    B, T, _ = state.shape
    robot_state = state[:, 0, :robot_dim]
    human_state = state[:, :, robot_dim:]
    h = jnp.zeros((B, hidden), jnp.float32)
    c = jnp.zeros((B, hidden), jnp.float32)
    bias = params["b_ih"] + params["b_hh"]
    for t in range(T):
        gates = human_state[:, t, :] @ params["w_ih"].T + h @ params["w_hh"].T + bias
        i = jax.nn.sigmoid(gates[:, 0 * hidden:1 * hidden])
        f = jax.nn.sigmoid(gates[:, 1 * hidden:2 * hidden])
        g = jnp.tanh(gates[:, 2 * hidden:3 * hidden])
        o = jax.nn.sigmoid(gates[:, 3 * hidden:4 * hidden])
        c = f * c + i * g
        h = o * jnp.tanh(c)
    joint = jnp.concatenate([robot_state, h], axis=1)
    z1 = jnp.maximum(joint @ params["w1"].T + params["b1"], 0.0)
    z2 = jnp.maximum(z1 @ params["w2"].T + params["b2"], 0.0)
    return z2 @ params["w3"].T + params["b3"]


if __name__ == "__main__":
    # Small, forward-consistent shapes.
    robot_dim, human_dim = 6, 10
    lstm_hidden_dim, num_actions = 32, 5
    B, T = 2, 8

    key = jax.random.PRNGKey(0)
    k_state, k_params = jax.random.split(key)
    state = jax.random.normal(k_state, (B, T, robot_dim + human_dim), jnp.float32)
    params = init_params(k_params, robot_dim, human_dim, lstm_hidden_dim, num_actions)

    # One-time weight relayout (outside the jitted per-call path).
    kparams = prepare_params(params, robot_dim=robot_dim, hidden=lstm_hidden_dim)

    q = network_forward(state, kparams, robot_dim=robot_dim, num_actions=num_actions)
    q = jax.block_until_ready(q)

    q_ref = network_reference(state, params, robot_dim=robot_dim, hidden=lstm_hidden_dim)
    np.testing.assert_allclose(np.asarray(q), np.asarray(q_ref), rtol=1e-4, atol=1e-4)

    print("KERNEL_OK")
</pallas_src>

<mosaic_0001>
module attributes {stable_mosaic.version = 11 : i64} {
  func.func @network_kernel(%arg0: memref<64x10xf32, #tpu.memory_space<vmem>>, %arg1: memref<8x6xf32, #tpu.memory_space<vmem>>, %arg2: memref<10x512xf32, #tpu.memory_space<vmem>>, %arg3: memref<128x512xf32, #tpu.memory_space<vmem>>, %arg4: memref<1x512xf32, #tpu.memory_space<vmem>>, %arg5: memref<6x256xf32, #tpu.memory_space<vmem>>, %arg6: memref<128x256xf32, #tpu.memory_space<vmem>>, %arg7: memref<1x256xf32, #tpu.memory_space<vmem>>, %arg8: memref<256x128xf32, #tpu.memory_space<vmem>>, %arg9: memref<1x128xf32, #tpu.memory_space<vmem>>, %arg10: memref<128x128xf32, #tpu.memory_space<vmem>>, %arg11: memref<1x128xf32, #tpu.memory_space<vmem>>, %arg12: memref<8x128xf32, #tpu.memory_space<vmem>>, %arg13: memref<64x512xf32, #tpu.memory_space<vmem>>) attributes {dimension_semantics = [], scalar_prefetch = 0 : i64, scratch_operands = 1 : i64, tpu.core_type = #tpu.core_type<tc>} {
    %c0 = arith.constant 0 : index
    %c0_0 = arith.constant 0 : index
    %0 = vector.load %arg0[%c0, %c0_0] : memref<64x10xf32, #tpu.memory_space<vmem>>, vector<64x10xf32>
    %c0_1 = arith.constant 0 : index
    %c0_2 = arith.constant 0 : index
    %1 = vector.load %arg2[%c0_1, %c0_2] : memref<10x512xf32, #tpu.memory_space<vmem>>, vector<10x512xf32>
    %cst = arith.constant dense<0.000000e+00> : vector<64x512xf32>
    %2 = tpu.matmul %0, %1, %cst {dimension_numbers = #tpu.dot_dimension_numbers<[1], [0], [0], [1], [0, 0, 1, 1], [], []>} : vector<64x10xf32>, vector<10x512xf32>, vector<64x512xf32> -> vector<64x512xf32>
    %c0_3 = arith.constant 0 : index
    %c0_4 = arith.constant 0 : index
    %3 = vector.load %arg4[%c0_3, %c0_4] : memref<1x512xf32, #tpu.memory_space<vmem>>, vector<1x512xf32>
    %4 = vector.broadcast %3 : vector<1x512xf32> to vector<64x512xf32>
    %5 = arith.addf %2, %4 : vector<64x512xf32>
    %c0_5 = arith.constant 0 : index
    %c0_6 = arith.constant 0 : index
    %6 = vector.load %arg13[%c0_5, %c0_6] : memref<64x512xf32, #tpu.memory_space<vmem>>, vector<64x512xf32>
    tpu.vector_store %arg13[%c0_5, %c0_6], %5 {strides = array<i32>} : memref<64x512xf32, #tpu.memory_space<vmem>>, vector<64x512xf32>,
    %cst_7 = arith.constant 0.000000e+00 : f32
    %7 = vector.broadcast %cst_7 : f32 to vector<8x128xf32>
    %cst_8 = arith.constant 0.000000e+00 : f32
    %8 = vector.broadcast %cst_8 : f32 to vector<8x128xf32>
    %c0_9 = arith.constant 0 : index
    %c0_10 = arith.constant 0 : index
    %9 = vector.load %arg13[%c0_9, %c0_10] : memref<64x512xf32, #tpu.memory_space<vmem>>, vector<8x512xf32>
    %c0_11 = arith.constant 0 : index
    %c0_12 = arith.constant 0 : index
    %10 = vector.load %arg3[%c0_11, %c0_12] : memref<128x512xf32, #tpu.memory_space<vmem>>, vector<128x512xf32>
    %cst_13 = arith.constant dense<0.000000e+00> : vector<8x512xf32>
    %11 = tpu.matmul %7, %10, %cst_13 {dimension_numbers = #tpu.dot_dimension_numbers<[1], [0], [0], [1], [0, 0, 1, 1], [], []>} : vector<8x128xf32>, vector<128x512xf32>, vector<8x512xf32> -> vector<8x512xf32>
    %12 = arith.addf %9, %11 : vector<8x512xf32>
    %13 = vector.extract_strided_slice %12 {offsets = [0, 0], sizes = [8, 384], strides = [1, 1]} : vector<8x512xf32> to vector<8x384xf32>
    %14 = arith.negf %13 : vector<8x384xf32>
    %15 = math.exp %14 : vector<8x384xf32>
    %cst_14 = arith.constant 1.000000e+00 : f32
    %16 = vector.broadcast %cst_14 : f32 to vector<8x384xf32>
    %17 = arith.addf %16, %15 : vector<8x384xf32>
    %18 = arith.divf %16, %17 : vector<8x384xf32>
    %19 = vector.extract_strided_slice %12 {offsets = [0, 384], sizes = [8, 128], strides = [1, 1]} : vector<8x512xf32> to vector<8x128xf32>
    %20 = math.tanh %19 : vector<8x128xf32>
    %21 = vector.extract_strided_slice %18 {offsets = [0, 0], sizes = [8, 128], strides = [1, 1]} : vector<8x384xf32> to vector<8x128xf32>
    %22 = vector.extract_strided_slice %18 {offsets = [0, 128], sizes = [8, 128], strides = [1, 1]} : vector<8x384xf32> to vector<8x128xf32>
    %23 = vector.extract_strided_slice %18 {offsets = [0, 256], sizes = [8, 128], strides = [1, 1]} : vector<8x384xf32> to vector<8x128xf32>
    %24 = arith.mulf %22, %8 : vector<8x128xf32>
    %25 = arith.mulf %21, %20 : vector<8x128xf32>
    %26 = arith.addf %24, %25 : vector<8x128xf32>
    %27 = math.tanh %26 : vector<8x128xf32>
    %28 = arith.mulf %23, %27 : vector<8x128xf32>
    %c8 = arith.constant 8 : index
    %c0_15 = arith.constant 0 : index
    %29 = vector.load %arg13[%c8, %c0_15] : memref<64x512xf32, #tpu.memory_space<vmem>>, vector<8x512xf32>
    %c0_16 = arith.constant 0 : index
    %c0_17 = arith.constant 0 : index
    %30 = vector.load %arg3[%c0_16, %c0_17] : memref<128x512xf32, #tpu.memory_space<vmem>>, vector<128x512xf32>
    %cst_18 = arith.constant dense<0.000000e+00> : vector<8x512xf32>
    %31 = tpu.matmul %28, %30, %cst_18 {dimension_numbers = #tpu.dot_dimension_numbers<[1], [0], [0], [1], [0, 0, 1, 1], [], []>} : vector<8x128xf32>, vector<128x512xf32>, vector<8x512xf32> -> vector<8x512xf32>
    %32 = arith.addf %29, %31 : vector<8x512xf32>
    %33 = vector.extract_strided_slice %32 {offsets = [0, 0], sizes = [8, 384], strides = [1, 1]} : vector<8x512xf32> to vector<8x384xf32>
    %34 = arith.negf %33 : vector<8x384xf32>
    %35 = math.exp %34 : vector<8x384xf32>
    %cst_19 = arith.constant 1.000000e+00 : f32
    %36 = vector.broadcast %cst_19 : f32 to vector<8x384xf32>
    %37 = arith.addf %36, %35 : vector<8x384xf32>
    %38 = arith.divf %36, %37 : vector<8x384xf32>
    %39 = vector.extract_strided_slice %32 {offsets = [0, 384], sizes = [8, 128], strides = [1, 1]} : vector<8x512xf32> to vector<8x128xf32>
    %40 = math.tanh %39 : vector<8x128xf32>
    %41 = vector.extract_strided_slice %38 {offsets = [0, 0], sizes = [8, 128], strides = [1, 1]} : vector<8x384xf32> to vector<8x128xf32>
    %42 = vector.extract_strided_slice %38 {offsets = [0, 128], sizes = [8, 128], strides = [1, 1]} : vector<8x384xf32> to vector<8x128xf32>
    %43 = vector.extract_strided_slice %38 {offsets = [0, 256], sizes = [8, 128], strides = [1, 1]} : vector<8x384xf32> to vector<8x128xf32>
    %44 = arith.mulf %42, %26 : vector<8x128xf32>
    %45 = arith.mulf %41, %40 : vector<8x128xf32>
    %46 = arith.addf %44, %45 : vector<8x128xf32>
    %47 = math.tanh %46 : vector<8x128xf32>
    %48 = arith.mulf %43, %47 : vector<8x128xf32>
    %c16 = arith.constant 16 : index
    %c0_20 = arith.constant 0 : index
    %49 = vector.load %arg13[%c16, %c0_20] : memref<64x512xf32, #tpu.memory_space<vmem>>, vector<8x512xf32>
    %c0_21 = arith.constant 0 : index
    %c0_22 = arith.constant 0 : index
    %50 = vector.load %arg3[%c0_21, %c0_22] : memref<128x512xf32, #tpu.memory_space<vmem>>, vector<128x512xf32>
    %cst_23 = arith.constant dense<0.000000e+00> : vector<8x512xf32>
    %51 = tpu.matmul %48, %50, %cst_23 {dimension_numbers = #tpu.dot_dimension_numbers<[1], [0], [0], [1], [0, 0, 1, 1], [], []>} : vector<8x128xf32>, vector<128x512xf32>, vector<8x512xf32> -> vector<8x512xf32>
    %52 = arith.addf %49, %51 : vector<8x512xf32>
    %53 = vector.extract_strided_slice %52 {offsets = [0, 0], sizes = [8, 384], strides = [1, 1]} : vector<8x512xf32> to vector<8x384xf32>
    %54 = arith.negf %53 : vector<8x384xf32>
    %55 = math.exp %54 : vector<8x384xf32>
    %cst_24 = arith.constant 1.000000e+00 : f32
    %56 = vector.broadcast %cst_24 : f32 to vector<8x384xf32>
    %57 = arith.addf %56, %55 : vector<8x384xf32>
    %58 = arith.divf %56, %57 : vector<8x384xf32>
    %59 = vector.extract_strided_slice %52 {offsets = [0, 384], sizes = [8, 128], strides = [1, 1]} : vector<8x512xf32> to vector<8x128xf32>
    %60 = math.tanh %59 : vector<8x128xf32>
    %61 = vector.extract_strided_slice %58 {offsets = [0, 0], sizes = [8, 128], strides = [1, 1]} : vector<8x384xf32> to vector<8x128xf32>
    %62 = vector.extract_strided_slice %58 {offsets = [0, 128], sizes = [8, 128], strides = [1, 1]} : vector<8x384xf32> to vector<8x128xf32>
    %63 = vector.extract_strided_slice %58 {offsets = [0, 256], sizes = [8, 128], strides = [1, 1]} : vector<8x384xf32> to vector<8x128xf32>
    %64 = arith.mulf %62, %46 : vector<8x128xf32>
    %65 = arith.mulf %61, %60 : vector<8x128xf32>
    %66 = arith.addf %64, %65 : vector<8x128xf32>
    %67 = math.tanh %66 : vector<8x128xf32>
    %68 = arith.mulf %63, %67 : vector<8x128xf32>
    %c24 = arith.constant 24 : index
    %c0_25 = arith.constant 0 : index
    %69 = vector.load %arg13[%c24, %c0_25] : memref<64x512xf32, #tpu.memory_space<vmem>>, vector<8x512xf32>
    %c0_26 = arith.constant 0 : index
    %c0_27 = arith.constant 0 : index
    %70 = vector.load %arg3[%c0_26, %c0_27] : memref<128x512xf32, #tpu.memory_space<vmem>>, vector<128x512xf32>
    %cst_28 = arith.constant dense<0.000000e+00> : vector<8x512xf32>
    %71 = tpu.matmul %68, %70, %cst_28 {dimension_numbers = #tpu.dot_dimension_numbers<[1], [0], [0], [1], [0, 0, 1, 1], [], []>} : vector<8x128xf32>, vector<128x512xf32>, vector<8x512xf32> -> vector<8x512xf32>
    %72 = arith.addf %69, %71 : vector<8x512xf32>
    %73 = vector.extract_strided_slice %72 {offsets = [0, 0], sizes = [8, 384], strides = [1, 1]} : vector<8x512xf32> to vector<8x384xf32>
    %74 = arith.negf %73 : vector<8x384xf32>
    %75 = math.exp %74 : vector<8x384xf32>
    %cst_29 = arith.constant 1.000000e+00 : f32
    %76 = vector.broadcast %cst_29 : f32 to vector<8x384xf32>
    %77 = arith.addf %76, %75 : vector<8x384xf32>
    %78 = arith.divf %76, %77 : vector<8x384xf32>
    %79 = vector.extract_strided_slice %72 {offsets = [0, 384], sizes = [8, 128], strides = [1, 1]} : vector<8x512xf32> to vector<8x128xf32>
    %80 = math.tanh %79 : vector<8x128xf32>
    %81 = vector.extract_strided_slice %78 {offsets = [0, 0], sizes = [8, 128], strides = [1, 1]} : vector<8x384xf32> to vector<8x128xf32>
    %82 = vector.extract_strided_slice %78 {offsets = [0, 128], sizes = [8, 128], strides = [1, 1]} : vector<8x384xf32> to vector<8x128xf32>
    %83 = vector.extract_strided_slice %78 {offsets = [0, 256], sizes = [8, 128], strides = [1, 1]} : vector<8x384xf32> to vector<8x128xf32>
    %84 = arith.mulf %82, %66 : vector<8x128xf32>
    %85 = arith.mulf %81, %80 : vector<8x128xf32>
    %86 = arith.addf %84, %85 : vector<8x128xf32>
    %87 = math.tanh %86 : vector<8x128xf32>
    %88 = arith.mulf %83, %87 : vector<8x128xf32>
    %c32 = arith.constant 32 : index
    %c0_30 = arith.constant 0 : index
    %89 = vector.load %arg13[%c32, %c0_30] : memref<64x512xf32, #tpu.memory_space<vmem>>, vector<8x512xf32>
    %c0_31 = arith.constant 0 : index
    %c0_32 = arith.constant 0 : index
    %90 = vector.load %arg3[%c0_31, %c0_32] : memref<128x512xf32, #tpu.memory_space<vmem>>, vector<128x512xf32>
    %cst_33 = arith.constant dense<0.000000e+00> : vector<8x512xf32>
    %91 = tpu.matmul %88, %90, %cst_33 {dimension_numbers = #tpu.dot_dimension_numbers<[1], [0], [0], [1], [0, 0, 1, 1], [], []>} : vector<8x128xf32>, vector<128x512xf32>, vector<8x512xf32> -> vector<8x512xf32>
    %92 = arith.addf %89, %91 : vector<8x512xf32>
    %93 = vector.extract_strided_slice %92 {offsets = [0, 0], sizes = [8, 384], strides = [1, 1]} : vector<8x512xf32> to vector<8x384xf32>
    %94 = arith.negf %93 : vector<8x384xf32>
    %95 = math.exp %94 : vector<8x384xf32>
    %cst_34 = arith.constant 1.000000e+00 : f32
    %96 = vector.broadcast %cst_34 : f32 to vector<8x384xf32>
    %97 = arith.addf %96, %95 : vector<8x384xf32>
    %98 = arith.divf %96, %97 : vector<8x384xf32>
    %99 = vector.extract_strided_slice %92 {offsets = [0, 384], sizes = [8, 128], strides = [1, 1]} : vector<8x512xf32> to vector<8x128xf32>
    %100 = math.tanh %99 : vector<8x128xf32>
    %101 = vector.extract_strided_slice %98 {offsets = [0, 0], sizes = [8, 128], strides = [1, 1]} : vector<8x384xf32> to vector<8x128xf32>
    %102 = vector.extract_strided_slice %98 {offsets = [0, 128], sizes = [8, 128], strides = [1, 1]} : vector<8x384xf32> to vector<8x128xf32>
    %103 = vector.extract_strided_slice %98 {offsets = [0, 256], sizes = [8, 128], strides = [1, 1]} : vector<8x384xf32> to vector<8x128xf32>
    %104 = arith.mulf %102, %86 : vector<8x128xf32>
    %105 = arith.mulf %101, %100 : vector<8x128xf32>
    %106 = arith.addf %104, %105 : vector<8x128xf32>
    %107 = math.tanh %106 : vector<8x128xf32>
    %108 = arith.mulf %103, %107 : vector<8x128xf32>
    %c40 = arith.constant 40 : index
    %c0_35 = arith.constant 0 : index
    %109 = vector.load %arg13[%c40, %c0_35] : memref<64x512xf32, #tpu.memory_space<vmem>>, vector<8x512xf32>
    %c0_36 = arith.constant 0 : index
    %c0_37 = arith.constant 0 : index
    %110 = vector.load %arg3[%c0_36, %c0_37] : memref<128x512xf32, #tpu.memory_space<vmem>>, vector<128x512xf32>
    %cst_38 = arith.constant dense<0.000000e+00> : vector<8x512xf32>
    %111 = tpu.matmul %108, %110, %cst_38 {dimension_numbers = #tpu.dot_dimension_numbers<[1], [0], [0], [1], [0, 0, 1, 1], [], []>} : vector<8x128xf32>, vector<128x512xf32>, vector<8x512xf32> -> vector<8x512xf32>
    %112 = arith.addf %109, %111 : vector<8x512xf32>
    %113 = vector.extract_strided_slice %112 {offsets = [0, 0], sizes = [8, 384], strides = [1, 1]} : vector<8x512xf32> to vector<8x384xf32>
    %114 = arith.negf %113 : vector<8x384xf32>
    %115 = math.exp %114 : vector<8x384xf32>
    %cst_39 = arith.constant 1.000000e+00 : f32
    %116 = vector.broadcast %cst_39 : f32 to vector<8x384xf32>
    %117 = arith.addf %116, %115 : vector<8x384xf32>
    %118 = arith.divf %116, %117 : vector<8x384xf32>
    %119 = vector.extract_strided_slice %112 {offsets = [0, 384], sizes = [8, 128], strides = [1, 1]} : vector<8x512xf32> to vector<8x128xf32>
    %120 = math.tanh %119 : vector<8x128xf32>
    %121 = vector.extract_strided_slice %118 {offsets = [0, 0], sizes = [8, 128], strides = [1, 1]} : vector<8x384xf32> to vector<8x128xf32>
    %122 = vector.extract_strided_slice %118 {offsets = [0, 128], sizes = [8, 128], strides = [1, 1]} : vector<8x384xf32> to vector<8x128xf32>
    %123 = vector.extract_strided_slice %118 {offsets = [0, 256], sizes = [8, 128], strides = [1, 1]} : vector<8x384xf32> to vector<8x128xf32>
    %124 = arith.mulf %122, %106 : vector<8x128xf32>
    %125 = arith.mulf %121, %120 : vector<8x128xf32>
    %126 = arith.addf %124, %125 : vector<8x128xf32>
    %127 = math.tanh %126 : vector<8x128xf32>
    %128 = arith.mulf %123, %127 : vector<8x128xf32>
    %c48 = arith.constant 48 : index
    %c0_40 = arith.constant 0 : index
    %129 = vector.load %arg13[%c48, %c0_40] : memref<64x512xf32, #tpu.memory_space<vmem>>, vector<8x512xf32>
    %c0_41 = arith.constant 0 : index
    %c0_42 = arith.constant 0 : index
    %130 = vector.load %arg3[%c0_41, %c0_42] : memref<128x512xf32, #tpu.memory_space<vmem>>, vector<128x512xf32>
    %cst_43 = arith.constant dense<0.000000e+00> : vector<8x512xf32>
    %131 = tpu.matmul %128, %130, %cst_43 {dimension_numbers = #tpu.dot_dimension_numbers<[1], [0], [0], [1], [0, 0, 1, 1], [], []>} : vector<8x128xf32>, vector<128x512xf32>, vector<8x512xf32> -> vector<8x512xf32>
    %132 = arith.addf %129, %131 : vector<8x512xf32>
    %133 = vector.extract_strided_slice %132 {offsets = [0, 0], sizes = [8, 384], strides = [1, 1]} : vector<8x512xf32> to vector<8x384xf32>
    %134 = arith.negf %133 : vector<8x384xf32>
    %135 = math.exp %134 : vector<8x384xf32>
    %cst_44 = arith.constant 1.000000e+00 : f32
    %136 = vector.broadcast %cst_44 : f32 to vector<8x384xf32>
    %137 = arith.addf %136, %135 : vector<8x384xf32>
    %138 = arith.divf %136, %137 : vector<8x384xf32>
    %139 = vector.extract_strided_slice %132 {offsets = [0, 384], sizes = [8, 128], strides = [1, 1]} : vector<8x512xf32> to vector<8x128xf32>
    %140 = math.tanh %139 : vector<8x128xf32>
    %141 = vector.extract_strided_slice %138 {offsets = [0, 0], sizes = [8, 128], strides = [1, 1]} : vector<8x384xf32> to vector<8x128xf32>
    %142 = vector.extract_strided_slice %138 {offsets = [0, 128], sizes = [8, 128], strides = [1, 1]} : vector<8x384xf32> to vector<8x128xf32>
    %143 = vector.extract_strided_slice %138 {offsets = [0, 256], sizes = [8, 128], strides = [1, 1]} : vector<8x384xf32> to vector<8x128xf32>
    %144 = arith.mulf %142, %126 : vector<8x128xf32>
    %145 = arith.mulf %141, %140 : vector<8x128xf32>
    %146 = arith.addf %144, %145 : vector<8x128xf32>
    %147 = math.tanh %146 : vector<8x128xf32>
    %148 = arith.mulf %143, %147 : vector<8x128xf32>
    %c56 = arith.constant 56 : index
    %c0_45 = arith.constant 0 : index
    %149 = vector.load %arg13[%c56, %c0_45] : memref<64x512xf32, #tpu.memory_space<vmem>>, vector<8x512xf32>
    %c0_46 = arith.constant 0 : index
    %c0_47 = arith.constant 0 : index
    %150 = vector.load %arg3[%c0_46, %c0_47] : memref<128x512xf32, #tpu.memory_space<vmem>>, vector<128x512xf32>
    %cst_48 = arith.constant dense<0.000000e+00> : vector<8x512xf32>
    %151 = tpu.matmul %148, %150, %cst_48 {dimension_numbers = #tpu.dot_dimension_numbers<[1], [0], [0], [1], [0, 0, 1, 1], [], []>} : vector<8x128xf32>, vector<128x512xf32>, vector<8x512xf32> -> vector<8x512xf32>
    %152 = arith.addf %149, %151 : vector<8x512xf32>
    %153 = vector.extract_strided_slice %152 {offsets = [0, 0], sizes = [8, 384], strides = [1, 1]} : vector<8x512xf32> to vector<8x384xf32>
    %154 = arith.negf %153 : vector<8x384xf32>
    %155 = math.exp %154 : vector<8x384xf32>
    %cst_49 = arith.constant 1.000000e+00 : f32
    %156 = vector.broadcast %cst_49 : f32 to vector<8x384xf32>
    %157 = arith.addf %156, %155 : vector<8x384xf32>
    %158 = arith.divf %156, %157 : vector<8x384xf32>
    %159 = vector.extract_strided_slice %152 {offsets = [0, 384], sizes = [8, 128], strides = [1, 1]} : vector<8x512xf32> to vector<8x128xf32>
    %160 = math.tanh %159 : vector<8x128xf32>
    %161 = vector.extract_strided_slice %158 {offsets = [0, 0], sizes = [8, 128], strides = [1, 1]} : vector<8x384xf32> to vector<8x128xf32>
    %162 = vector.extract_strided_slice %158 {offsets = [0, 128], sizes = [8, 128], strides = [1, 1]} : vector<8x384xf32> to vector<8x128xf32>
    %163 = vector.extract_strided_slice %158 {offsets = [0, 256], sizes = [8, 128], strides = [1, 1]} : vector<8x384xf32> to vector<8x128xf32>
    %164 = arith.mulf %162, %146 : vector<8x128xf32>
    %165 = arith.mulf %161, %160 : vector<8x128xf32>
    %166 = arith.addf %164, %165 : vector<8x128xf32>
    %167 = math.tanh %166 : vector<8x128xf32>
    %168 = arith.mulf %163, %167 : vector<8x128xf32>
    %c0_50 = arith.constant 0 : index
    %c0_51 = arith.constant 0 : index
    %169 = vector.load %arg1[%c0_50, %c0_51] : memref<8x6xf32, #tpu.memory_space<vmem>>, vector<8x6xf32>
    %c0_52 = arith.constant 0 : index
    %c0_53 = arith.constant 0 : index
    %170 = vector.load %arg5[%c0_52, %c0_53] : memref<6x256xf32, #tpu.memory_space<vmem>>, vector<6x256xf32>
    %cst_54 = arith.constant dense<0.000000e+00> : vector<8x256xf32>
    %171 = tpu.matmul %169, %170, %cst_54 {dimension_numbers = #tpu.dot_dimension_numbers<[1], [0], [0], [1], [0, 0, 1, 1], [], []>} : vector<8x6xf32>, vector<6x256xf32>, vector<8x256xf32> -> vector<8x256xf32>
    %c0_55 = arith.constant 0 : index
    %c0_56 = arith.constant 0 : index
    %172 = vector.load %arg6[%c0_55, %c0_56] : memref<128x256xf32, #tpu.memory_space<vmem>>, vector<128x256xf32>
    %cst_57 = arith.constant dense<0.000000e+00> : vector<8x256xf32>
    %173 = tpu.matmul %168, %172, %cst_57 {dimension_numbers = #tpu.dot_dimension_numbers<[1], [0], [0], [1], [0, 0, 1, 1], [], []>} : vector<8x128xf32>, vector<128x256xf32>, vector<8x256xf32> -> vector<8x256xf32>
    %174 = arith.addf %171, %173 : vector<8x256xf32>
    %c0_58 = arith.constant 0 : index
    %c0_59 = arith.constant 0 : index
    %175 = vector.load %arg7[%c0_58, %c0_59] : memref<1x256xf32, #tpu.memory_space<vmem>>, vector<1x256xf32>
    %176 = vector.broadcast %175 : vector<1x256xf32> to vector<8x256xf32>
    %177 = arith.addf %174, %176 : vector<8x256xf32>
    %cst_60 = arith.constant 0.000000e+00 : f32
    %178 = vector.broadcast %cst_60 : f32 to vector<8x256xf32>
    %179 = arith.maximumf %177, %178 : vector<8x256xf32>
    %c0_61 = arith.constant 0 : index
    %c0_62 = arith.constant 0 : index
    %180 = vector.load %arg8[%c0_61, %c0_62] : memref<256x128xf32, #tpu.memory_space<vmem>>, vector<256x128xf32>
    %cst_63 = arith.constant dense<0.000000e+00> : vector<8x128xf32>
    %181 = tpu.matmul %179, %180, %cst_63 {dimension_numbers = #tpu.dot_dimension_numbers<[1], [0], [0], [1], [0, 0, 1, 1], [], []>} : vector<8x256xf32>, vector<256x128xf32>, vector<8x128xf32> -> vector<8x128xf32>
    %c0_64 = arith.constant 0 : index
    %c0_65 = arith.constant 0 : index
    %182 = vector.load %arg9[%c0_64, %c0_65] : memref<1x128xf32, #tpu.memory_space<vmem>>, vector<1x128xf32>
    %183 = vector.broadcast %182 : vector<1x128xf32> to vector<8x128xf32>
    %184 = arith.addf %181, %183 : vector<8x128xf32>
    %cst_66 = arith.constant 0.000000e+00 : f32
    %185 = vector.broadcast %cst_66 : f32 to vector<8x128xf32>
    %186 = arith.maximumf %184, %185 : vector<8x128xf32>
    %c0_67 = arith.constant 0 : index
    %c0_68 = arith.constant 0 : index
    %187 = vector.load %arg10[%c0_67, %c0_68] : memref<128x128xf32, #tpu.memory_space<vmem>>, vector<128x128xf32>
    %cst_69 = arith.constant dense<0.000000e+00> : vector<8x128xf32>
    %188 = tpu.matmul %186, %187, %cst_69 {dimension_numbers = #tpu.dot_dimension_numbers<[1], [0], [0], [1], [0, 0, 1, 1], [], []>} : vector<8x128xf32>, vector<128x128xf32>, vector<8x128xf32> -> vector<8x128xf32>
    %c0_70 = arith.constant 0 : index
    %c0_71 = arith.constant 0 : index
    %189 = vector.load %arg11[%c0_70, %c0_71] : memref<1x128xf32, #tpu.memory_space<vmem>>, vector<1x128xf32>
    %190 = vector.broadcast %189 : vector<1x128xf32> to vector<8x128xf32>
    %191 = arith.addf %188, %190 : vector<8x128xf32>
    %c0_72 = arith.constant 0 : index
    %c0_73 = arith.constant 0 : index
    %192 = vector.load %arg12[%c0_72, %c0_73] : memref<8x128xf32, #tpu.memory_space<vmem>>, vector<8x128xf32>
    tpu.vector_store %arg12[%c0_72, %c0_73], %191 {strides = array<i32>} : memref<8x128xf32, #tpu.memory_space<vmem>>, vector<8x128xf32>,
    return
  }
}

</mosaic_0001>

<llo_original>
// kernel: network_forward.1
$region0: #{network_forward.1}
  #allocation0 [shape = 'u32[]', space=smem, size = 0x4, offset = 0x4, fixed_abs, tag = 'smem constant byte address 0x4 - core index']
  #allocation1 [shape = 'u32[144,128]{1,0:T(1,128)}', space=vmem, size = 0x12000, scoped, tag = 'internal scratch']
  #allocation2 [shape = 'f32[64,512]{1,0:T(8,128)}', space=vmem, size = 0x20000, scoped, tag = 'scratch operand']
  %s0 = inlined_call_operand.vmem [shape: f32[64,10], index: 0, kind: input, shape index: {}]
  %s1 = inlined_call_operand.vmem [shape: f32[8,6], index: 1, kind: input, shape index: {}]
  %s2 = inlined_call_operand.hbm [shape: f32[10,512], index: 2, kind: input, shape index: {}]
  %s3 = inlined_call_operand.hbm [shape: f32[128,512], index: 3, kind: input, shape index: {}]
  %s4 = inlined_call_operand.vmem [shape: f32[1,512], index: 4, kind: input, shape index: {}]
  %s5 = inlined_call_operand.vmem [shape: f32[6,256], index: 5, kind: input, shape index: {}]
  %s6 = inlined_call_operand.hbm [shape: f32[128,256], index: 6, kind: input, shape index: {}]
  %s7 = inlined_call_operand.vmem [shape: f32[1,256], index: 7, kind: input, shape index: {}]
  %s8 = inlined_call_operand.hbm [shape: f32[256,128], index: 8, kind: input, shape index: {}]
  %s9 = inlined_call_operand.vmem [shape: f32[1,128], index: 9, kind: input, shape index: {}]
  %s10 = inlined_call_operand.vmem [shape: f32[128,128], index: 10, kind: input, shape index: {}]
  %s11 = inlined_call_operand.vmem [shape: f32[1,128], index: 11, kind: input, shape index: {}]
  %s12 = inlined_call_operand.vmem [shape: f32[8,128], index: 12, kind: output, shape index: {}]
  %s13 = sld [smem:[#allocation0]]
  $region74: #{network_forward.1} parent=0
    _
  %s15 = ssub.s32 1, %s13
  %s16 = scalar_select 0, %s15, %s13
  $region1: #{network_forward.1} parent=0
    #allocation3 [shape = 'u8[32768]{0}', space=vmem, size = 0x8000, scoped, tag = 'input window, operand 2, single buffered']
    #allocation4 [shape = 's32[1]{0}', space=sflag, size = 0x4, scoped, tag = 'scoped memory for network_forward.1']
    #allocation5 [shape = 'u8[262144]{0}', space=vmem, size = 0x40000, scoped, tag = 'input window, operand 3, single buffered']
    #allocation6 [shape = 's32[1]{0}', space=sflag, size = 0x4, scoped, tag = 'scoped memory for network_forward.1']
    #allocation7 [shape = 'u8[131072]{0}', space=vmem, size = 0x20000, scoped, tag = 'input window, operand 6, single buffered']
    #allocation8 [shape = 'u8[131072]{0}', space=vmem, size = 0x20000, scoped, tag = 'input window, operand 8, single buffered']
    #allocation9 [shape = 's32[1]{0}', space=sflag, size = 0x4, scoped, tag = 'scoped memory for network_forward.1']
    %17 = vsyncpa [#allocation4], 0
    %18 = vsyncpa [#allocation6], 0
    %19 = vsyncpa [#allocation9], 0
    // Predicated region
    $region2: #{network_forward.1} parent=1 // pred_check
      _
    $region3: #{network_forward.1} parent=1 // pred_check_branch
      %21 = sbr.rel (0) target = $region5
    $region4: #{network_forward.1} parent=1 // pred_region
      _
    $region5: #{network_forward.1} parent=1 // pred_fallthru
      _
    // Predicated region
    $region6: #{network_forward.1} parent=1 // pred_check
      _
    $region7: #{network_forward.1} parent=1 // pred_check_branch
      %23 = sbr.rel (0) target = $region9
    $region8: #{network_forward.1} parent=1 // pred_region
      _
    $region9: #{network_forward.1} parent=1 // pred_fallthru
      _
    // Predicated region
    $region10: #{network_forward.1} parent=1 // pred_check
      _
    $region11: #{network_forward.1} parent=1 // pred_check_branch
      %25 = sbr.rel (0) target = $region13
    $region12: #{network_forward.1} parent=1 // pred_region
      %s27 = ssub.s32 1024, 1024
      %28 = vsyncadd [#allocation4], %s27
      %s29 = sshll.u32 [#allocation3], 4
      %s30 = int_to_ptr.vmem [resolvable:$true] %s29
      %35 = dma.hbm_to_vmem [thread:$0]  %s2, 1024, %s30, [#allocation4], 512, 512, 32
    $region13: #{network_forward.1} parent=1 // pred_fallthru
      _
    // Predicated region
    $region14: #{network_forward.1} parent=1 // pred_check
      _
    $region15: #{network_forward.1} parent=1 // pred_check_branch
      %37 = sbr.rel (0) target = $region17
    $region16: #{network_forward.1} parent=1 // pred_region
      %s39 = ssub.s32 8192, 8192
      %40 = vsyncadd [#allocation6], %s39
      %s41 = sshll.u32 [#allocation5], 4
      %s42 = int_to_ptr.vmem [resolvable:$true] %s41
      %47 = dma.hbm_to_vmem [thread:$0]  %s3, 8192, %s42, [#allocation6], 512, 512, 32
    $region17: #{network_forward.1} parent=1 // pred_fallthru
      _
    // Predicated region
    $region18: #{network_forward.1} parent=1 // pred_check
      _
    $region19: #{network_forward.1} parent=1 // pred_check_branch
      %49 = sbr.rel (0) target = $region21
    $region20: #{network_forward.1} parent=1 // pred_region
      _
    $region21: #{network_forward.1} parent=1 // pred_fallthru
      _
    // Predicated region
    $region22: #{network_forward.1} parent=1 // pred_check
      _
    $region23: #{network_forward.1} parent=1 // pred_check_branch
      %51 = sbr.rel (0) target = $region25
    $region24: #{network_forward.1} parent=1 // pred_region
      _
    $region25: #{network_forward.1} parent=1 // pred_fallthru
      _
    // Predicated region
    $region26: #{network_forward.1} parent=1 // pred_check
      _
    $region27: #{network_forward.1} parent=1 // pred_check_branch
      %53 = sbr.rel (0) target = $region29
    $region28: #{network_forward.1} parent=1 // pred_region
      %s55 = ssub.s32 4096, 4096
      %56 = vsyncadd [#allocation6], %s55
      %s57 = sshll.u32 [#allocation7], 4
      %s58 = int_to_ptr.vmem [resolvable:$true] %s57
      %63 = dma.hbm_to_vmem [thread:$0]  %s6, 4096, %s58, [#allocation6], 256, 256, 16
    $region29: #{network_forward.1} parent=1 // pred_fallthru
      _
    // Predicated region
    $region30: #{network_forward.1} parent=1 // pred_check
      _
    $region31: #{network_forward.1} parent=1 // pred_check_branch
      %65 = sbr.rel (0) target = $region33
    $region32: #{network_forward.1} parent=1 // pred_region
      _
    $region33: #{network_forward.1} parent=1 // pred_fallthru
      _
    // Predicated region
    $region34: #{network_forward.1} parent=1 // pred_check
      _
    $region35: #{network_forward.1} parent=1 // pred_check_branch
      %67 = sbr.rel (0) target = $region37
    $region36: #{network_forward.1} parent=1 // pred_region
      %s69 = ssub.s32 4096, 4096
      %70 = vsyncadd [#allocation9], %s69
      %s71 = sshll.u32 [#allocation8], 4
      %s72 = int_to_ptr.vmem [resolvable:$true] %s71
      %77 = dma.hbm_to_vmem [thread:$0]  %s8, 4096, %s72, [#allocation9], 128, 128, 8
    $region37: #{network_forward.1} parent=1 // pred_fallthru
      _
    // Predicated region
    $region38: #{network_forward.1} parent=1 // pred_check
      _
    $region39: #{network_forward.1} parent=1 // pred_check_branch
      %79 = sbr.rel (0) target = $region41
    $region40: #{network_forward.1} parent=1 // pred_region
      _
    $region41: #{network_forward.1} parent=1 // pred_fallthru
      _
    // Predicated region
    $region42: #{network_forward.1} parent=1 // pred_check
      _
    $region43: #{network_forward.1} parent=1 // pred_check_branch
      %81 = sbr.rel (0) target = $region45
    $region44: #{network_forward.1} parent=1 // pred_region
      _
    $region45: #{network_forward.1} parent=1 // pred_fallthru
      _
    // Predicated region
    $region46: #{network_forward.1} parent=1 // pred_check
      _
    $region47: #{network_forward.1} parent=1 // pred_check_branch
      %83 = sbr.rel (0) target = $region49
    $region48: #{network_forward.1} parent=1 // pred_region
      _
    $region49: #{network_forward.1} parent=1 // pred_fallthru
      _
    // Predicated region
    $region50: #{network_forward.1} parent=1 // pred_check
      _
    $region51: #{network_forward.1} parent=1 // pred_check_branch
      %85 = sbr.rel (0) target = $region53
    $region52: #{network_forward.1} parent=1 // pred_region
      %86 = dma.done [#allocation4], 1024
    $region53: #{network_forward.1} parent=1 // pred_fallthru
      _
    // Predicated region
    $region54: #{network_forward.1} parent=1 // pred_check
      _
    $region55: #{network_forward.1} parent=1 // pred_check_branch
      %88 = sbr.rel (0) target = $region57
    $region56: #{network_forward.1} parent=1 // pred_region
      %89 = dma.done [#allocation6], 8192
    $region57: #{network_forward.1} parent=1 // pred_fallthru
      _
    // Predicated region
    $region58: #{network_forward.1} parent=1 // pred_check
      _
    $region59: #{network_forward.1} parent=1 // pred_check_branch
      %91 = sbr.rel (0) target = $region61
    $region60: #{network_forward.1} parent=1 // pred_region
      %92 = dma.done [#allocation6], 4096
    $region61: #{network_forward.1} parent=1 // pred_fallthru
      _
    // Predicated region
    $region62: #{network_forward.1} parent=1 // pred_check
      _
    $region63: #{network_forward.1} parent=1 // pred_check_branch
      %94 = sbr.rel (0) target = $region65
    $region64: #{network_forward.1} parent=1 // pred_region
      %95 = dma.done [#allocation9], 4096
    $region65: #{network_forward.1} parent=1 // pred_fallthru
      _
    %v96 = vld [vmem:[%s0] sm:$0xff]
    %v97 = vld [vmem:[%s0 + $0x8] sm:$0xff]
    %v98 = vld [vmem:[%s0 + $0x10] sm:$0xff]
    %v99 = vld [vmem:[%s0 + $0x18] sm:$0xff]
    %v100 = vld [vmem:[%s0 + $0x20] sm:$0xff]
    %v101 = vld [vmem:[%s0 + $0x28] sm:$0xff]
    %v102 = vld [vmem:[%s0 + $0x30] sm:$0xff]
    %v103 = vld [vmem:[%s0 + $0x38] sm:$0xff]
    %v104 = vld [vmem:[#allocation3] sm:$0xff]
    %v105 = vld [vmem:[#allocation3 + $0x8] sm:$0xff]
    %v106 = vld [vmem:[#allocation3 + $0x10] sm:$0xff]
    %v107 = vld [vmem:[#allocation3 + $0x18] sm:$0xff]
    %v108 = vld [vmem:[#allocation3 + $0x20] sm:$0x3]
    %v109 = vld [vmem:[#allocation3 + $0x28] sm:$0x3]
    %v110 = vld [vmem:[#allocation3 + $0x30] sm:$0x3]
    %v111 = vld [vmem:[#allocation3 + $0x38] sm:$0x3]
    %v112 = vld [vmem:[%s4] sm:$0xf]
    %v114 = vlaneseq
    %v115 = vshrl.u32 %v114, 7
    %v116 = vsub.s32 0, %v115
    %v117 = vrot.slane %v112, %v116
    %v118 = vlaneseq
    %v119 = vshrl.u32 %v118, 7
    %v120 = vsub.s32 1, %v119
    %v121 = vrot.slane %v112, %v120
    %v122 = vlaneseq
    %v123 = vshrl.u32 %v122, 7
    %v124 = vsub.s32 2, %v123
    %v125 = vrot.slane %v112, %v124
    %v126 = vlaneseq
    %v127 = vshrl.u32 %v126, 7
    %v128 = vsub.s32 3, %v127
    %v129 = vrot.slane %v112, %v128
    %vm134 = vcmask 80896
    %v136 = vsel %vm134, %v96, 0
    %v139 = vsel %vm134, %v97, 0
    %v142 = vsel %vm134, %v98, 0
    %v145 = vsel %vm134, %v99, 0
    %v148 = vsel %vm134, %v100, 0
    %v151 = vsel %vm134, %v101, 0
    %v154 = vsel %vm134, %v102, 0
    %v157 = vsel %vm134, %v103, 0
    %vm159 = vcmask 1041408
    %v161 = vsel %vm159, %v108, 0
    %v164 = vsel %vm159, %v109, 0
    %v167 = vsel %vm159, %v110, 0
    %v170 = vsel %vm159, %v111, 0
    %172 = vmatprep.subr.mxu0 %v105
    %173 = vmatpush1.msra.mxu0 %v104
    %174 = vmatprep.subr.mxu0 %v164
    %175 = vmatpush1.msra.mxu0 %v161
    %176 = vmatprep.subr.mxu0 0.0
    %177 = vmatpush1.msra.mxu0 0.0
    %178 = vmatprep.subr.mxu0 0.0
    %179 = vmatpush1.msra.mxu0 0.0
    %180 = vmatprep.subr.mxu0 0.0
    %181 = vmatpush1.msra.mxu0 0.0
    %182 = vmatprep.subr.mxu0 0.0
    %183 = vmatpush1.msra.mxu0 0.0
    %184 = vmatprep.subr.mxu0 0.0
    %185 = vmatpush1.msra.mxu0 0.0
    %186 = vmatprep.subr.mxu0 0.0
    %187 = vmatpush1.msra.mxu0 0.0
    %188 = vmatprep.subr.mxu0 0.0
    %189 = vmatpush1.msra.mxu0 0.0
    %190 = vmatprep.subr.mxu0 0.0
    %191 = vmatpush1.msra.mxu0 0.0
    %192 = vmatprep.subr.mxu0 0.0
    %193 = vmatpush1.msra.mxu0 0.0
    %194 = vmatprep.subr.mxu0 0.0
    %195 = vmatpush1.msra.mxu0 0.0
    %196 = vmatprep.subr.mxu0 0.0
    %197 = vmatpush1.msra.mxu0 0.0
    %198 = vmatprep.subr.mxu0 0.0
    %199 = vmatpush1.msra.mxu0 0.0
    %200 = vmatprep.subr.mxu0 0.0
    %201 = vmatpush1.msra.mxu0 0.0
    %202 = vmatprep.subr.mxu0 0.0
    %203 = vmatpush1.msra.mxu0 0.0
    %204 = vmatprep.subr.mxu0 0.0
    %205 = vmatpush1.msra.mxu0 0.0
    %206 = vmatprep.subr.mxu0 0.0
    %207 = vmatpush1.msra.mxu0 0.0
    %208 = vmatprep.subr.mxu0 0.0
    %209 = vmatpush1.msra.mxu0 0.0
    %210 = vmatprep.subr.mxu0 0.0
    %211 = vmatpush1.msra.mxu0 0.0
    %212 = vmatprep.subr.mxu0 0.0
    %213 = vmatpush1.msra.mxu0 0.0
    %214 = vmatprep.subr.mxu0 0.0
    %215 = vmatpush1.msra.mxu0 0.0
    %216 = vmatprep.subr.mxu0 0.0
    %217 = vmatpush1.msra.mxu0 0.0
    %218 = vmatprep.subr.mxu0 0.0
    %219 = vmatpush1.msra.mxu0 0.0
    %220 = vmatprep.subr.mxu0 0.0
    %221 = vmatpush1.msra.mxu0 0.0
    %222 = vmatprep.subr.mxu0 0.0
    %223 = vmatpush1.msra.mxu0 0.0
    %224 = vmatprep.subr.mxu0 0.0
    %225 = vmatpush1.msra.mxu0 0.0
    %226 = vmatprep.subr.mxu0 0.0
    %227 = vmatpush1.msra.mxu0 0.0
    %228 = vmatprep.subr.mxu0 0.0
    %229 = vmatpush1.msra.mxu0 0.0
    %230 = vmatprep.subr.mxu0 0.0
    %231 = vmatpush1.msra.mxu0 0.0
    %232 = vmatprep.subr.mxu0 0.0
    %233 = vmatpush1.msra.mxu0 0.0
    %234 = vmatprep.subr.mxu0 0.0
    %235 = vmatpush1.msra.mxu0 0.0
    %236 = vmatprep.mubr.f32.mxu0 0.0
    %237 = vmatmul.mubr.f32.gmra.mrb[0].mxu0 %v136
    %v238 = vpop.f32.mrb[0].mxu0
    %v239 = vadd.f32 %v117, %v238
    %v240 = vpop.f32.mrb[0].mxu0
    %v241 = vadd.f32 %v121, %v240
    %242 = vmatprep.mubr.f32.mxu0 0.0
    %243 = vmatmul.mubr.f32.gmra.mrb[0].mxu0 %v139
    %v244 = vpop.f32.mrb[0].mxu0
    %v245 = vadd.f32 %v117, %v244
    %v246 = vpop.f32.mrb[0].mxu0
    %v247 = vadd.f32 %v121, %v246
    %248 = vmatprep.mubr.f32.mxu0 0.0
    %249 = vmatmul.mubr.f32.gmra.mrb[0].mxu0 %v142
    %v250 = vpop.f32.mrb[0].mxu0
    %v251 = vadd.f32 %v117, %v250
    %v252 = vpop.f32.mrb[0].mxu0
    %v253 = vadd.f32 %v121, %v252
    %254 = vmatprep.mubr.f32.mxu0 0.0
    %255 = vmatmul.mubr.f32.gmra.mrb[0].mxu0 %v145
    %v256 = vpop.f32.mrb[0].mxu0
    %v257 = vadd.f32 %v117, %v256
    %v258 = vpop.f32.mrb[0].mxu0
    %v259 = vadd.f32 %v121, %v258
    %260 = vmatprep.mubr.f32.mxu0 0.0
    %261 = vmatmul.mubr.f32.gmra.mrb[0].mxu0 %v148
    %v262 = vpop.f32.mrb[0].mxu0
    %v263 = vadd.f32 %v117, %v262
    %v264 = vpop.f32.mrb[0].mxu0
    %v265 = vadd.f32 %v121, %v264
    %266 = vmatprep.mubr.f32.mxu0 0.0
    %267 = vmatmul.mubr.f32.gmra.mrb[0].mxu0 %v151
    %v268 = vpop.f32.mrb[0].mxu0
    %v269 = vadd.f32 %v117, %v268
    %v270 = vpop.f32.mrb[0].mxu0
    %v271 = vadd.f32 %v121, %v270
    %272 = vmatprep.mubr.f32.mxu0 0.0
    %273 = vmatmul.mubr.f32.gmra.mrb[0].mxu0 %v154
    %v274 = vpop.f32.mrb[0].mxu0
    %v275 = vadd.f32 %v117, %v274
    %v276 = vpop.f32.mrb[0].mxu0
    %v277 = vadd.f32 %v121, %v276
    %278 = vmatprep.mubr.f32.mxu0 0.0
    %279 = vmatmul.mubr.f32.gmra.mrb[0].mxu0 %v157
    %v280 = vpop.f32.mrb[0].mxu0
    %v281 = vadd.f32 %v117, %v280
    %v282 = vpop.f32.mrb[0].mxu0
    %v283 = vadd.f32 %v121, %v282
    %284 = vdwg.mxu0
    %285 = vmatprep.subr.mxu0 %v107
    %286 = vmatpush1.msra.mxu0 %v106
    %287 = vmatprep.subr.mxu0 %v170
    %288 = vmatpush1.msra.mxu0 %v167
    %289 = vmatprep.subr.mxu0 0.0
    %290 = vmatpush1.msra.mxu0 0.0
    %291 = vmatprep.subr.mxu0 0.0
    %292 = vmatpush1.msra.mxu0 0.0
    %293 = vmatprep.subr.mxu0 0.0
    %294 = vmatpush1.msra.mxu0 0.0
    %295 = vmatprep.subr.mxu0 0.0
    %296 = vmatpush1.msra.mxu0 0.0
    %297 = vmatprep.subr.mxu0 0.0
    %298 = vmatpush1.msra.mxu0 0.0
    %299 = vmatprep.subr.mxu0 0.0
    %300 = vmatpush1.msra.mxu0 0.0
    %301 = vmatprep.subr.mxu0 0.0
    %302 = vmatpush1.msra.mxu0 0.0
    %303 = vmatprep.subr.mxu0 0.0
    %304 = vmatpush1.msra.mxu0 0.0
    %305 = vmatprep.subr.mxu0 0.0
    %306 = vmatpush1.msra.mxu0 0.0
    %307 = vmatprep.subr.mxu0 0.0
    %308 = vmatpush1.msra.mxu0 0.0
    %309 = vmatprep.subr.mxu0 0.0
    %310 = vmatpush1.msra.mxu0 0.0
    %311 = vmatprep.subr.mxu0 0.0
    %312 = vmatpush1.msra.mxu0 0.0
    %313 = vmatprep.subr.mxu0 0.0
    %314 = vmatpush1.msra.mxu0 0.0
    %315 = vmatprep.subr.mxu0 0.0
    %316 = vmatpush1.msra.mxu0 0.0
    %317 = vmatprep.subr.mxu0 0.0
    %318 = vmatpush1.msra.mxu0 0.0
    %319 = vmatprep.subr.mxu0 0.0
    %320 = vmatpush1.msra.mxu0 0.0
    %321 = vmatprep.subr.mxu0 0.0
    %322 = vmatpush1.msra.mxu0 0.0
    %323 = vmatprep.subr.mxu0 0.0
    %324 = vmatpush1.msra.mxu0 0.0
    %325 = vmatprep.subr.mxu0 0.0
    %326 = vmatpush1.msra.mxu0 0.0
    %327 = vmatprep.subr.mxu0 0.0
    %328 = vmatpush1.msra.mxu0 0.0
    %329 = vmatprep.subr.mxu0 0.0
    %330 = vmatpush1.msra.mxu0 0.0
    %331 = vmatprep.subr.mxu0 0.0
    %332 = vmatpush1.msra.mxu0 0.0
    %333 = vmatprep.subr.mxu0 0.0
    %334 = vmatpush1.msra.mxu0 0.0
    %335 = vmatprep.subr.mxu0 0.0
    %336 = vmatpush1.msra.mxu0 0.0
    %337 = vmatprep.subr.mxu0 0.0
    %338 = vmatpush1.msra.mxu0 0.0
    %339 = vmatprep.subr.mxu0 0.0
    %340 = vmatpush1.msra.mxu0 0.0
    %341 = vmatprep.subr.mxu0 0.0
    %342 = vmatpush1.msra.mxu0 0.0
    %343 = vmatprep.subr.mxu0 0.0
    %344 = vmatpush1.msra.mxu0 0.0
    %345 = vmatprep.subr.mxu0 0.0
    %346 = vmatpush1.msra.mxu0 0.0
    %347 = vmatprep.subr.mxu0 0.0
    %348 = vmatpush1.msra.mxu0 0.0
    %349 = vmatprep.mubr.f32.mxu0 0.0
    %350 = vmatmul.mubr.f32.gmra.mrb[0].mxu0 %v136
    %v351 = vpop.f32.mrb[0].mxu0
    %v352 = vadd.f32 %v125, %v351
    %v353 = vpop.f32.mrb[0].mxu0
    %v354 = vadd.f32 %v129, %v353
    %355 = vmatprep.mubr.f32.mxu0 0.0
    %356 = vmatmul.mubr.f32.gmra.mrb[0].mxu0 %v139
    %v357 = vpop.f32.mrb[0].mxu0
    %v358 = vadd.f32 %v125, %v357
    %v359 = vpop.f32.mrb[0].mxu0
    %v360 = vadd.f32 %v129, %v359
    %361 = vmatprep.mubr.f32.mxu0 0.0
    %362 = vmatmul.mubr.f32.gmra.mrb[0].mxu0 %v142
    %v363 = vpop.f32.mrb[0].mxu0
    %v364 = vadd.f32 %v125, %v363
    %v365 = vpop.f32.mrb[0].mxu0
    %v366 = vadd.f32 %v129, %v365
    %367 = vmatprep.mubr.f32.mxu0 0.0
    %368 = vmatmul.mubr.f32.gmra.mrb[0].mxu0 %v145
    %v369 = vpop.f32.mrb[0].mxu0
    %v370 = vadd.f32 %v125, %v369
    %v371 = vpop.f32.mrb[0].mxu0
    %v372 = vadd.f32 %v129, %v371
    %373 = vmatprep.mubr.f32.mxu0 0.0
    %374 = vmatmul.mubr.f32.gmra.mrb[0].mxu0 %v148
    %v375 = vpop.f32.mrb[0].mxu0
    %v376 = vadd.f32 %v125, %v375
    %v377 = vpop.f32.mrb[0].mxu0
    %v378 = vadd.f32 %v129, %v377
    %379 = vmatprep.mubr.f32.mxu0 0.0
    %380 = vmatmul.mubr.f32.gmra.mrb[0].mxu0 %v151
    %v381 = vpop.f32.mrb[0].mxu0
    %v382 = vadd.f32 %v125, %v381
    %v383 = vpop.f32.mrb[0].mxu0
    %v384 = vadd.f32 %v129, %v383
    %385 = vmatprep.mubr.f32.mxu0 0.0
    %386 = vmatmul.mubr.f32.gmra.mrb[0].mxu0 %v154
    %v387 = vpop.f32.mrb[0].mxu0
    %v388 = vadd.f32 %v125, %v387
    %v389 = vpop.f32.mrb[0].mxu0
    %v390 = vadd.f32 %v129, %v389
    %391 = vmatprep.mubr.f32.mxu0 0.0
    %392 = vmatmul.mubr.f32.gmra.mrb[0].mxu0 %v157
    %v393 = vpop.f32.mrb[0].mxu0
    %v394 = vadd.f32 %v125, %v393
    %v395 = vpop.f32.mrb[0].mxu0
    %v396 = vadd.f32 %v129, %v395
    %397 = vdwg.mxu0
    %398 = vst [vmem:[#allocation2] sm:$0xff] %v239
    %399 = vst [vmem:[#allocation2 + $0x8] sm:$0xff] %v241
    %400 = vst [vmem:[#allocation2 + $0x10] sm:$0xff] %v352
    %401 = vst [vmem:[#allocation2 + $0x18] sm:$0xff] %v354
    %402 = vst [vmem:[#allocation2 + $0x20] sm:$0xff] %v245
    %403 = vst [vmem:[#allocation2 + $0x28] sm:$0xff] %v247
    %404 = vst [vmem:[#allocation2 + $0x30] sm:$0xff] %v358
    %405 = vst [vmem:[#allocation2 + $0x38] sm:$0xff] %v360
    %406 = vst [vmem:[#allocation2 + $0x40] sm:$0xff] %v251
    %407 = vst [vmem:[#allocation2 + $0x48] sm:$0xff] %v253
    %408 = vst [vmem:[#allocation2 + $0x50] sm:$0xff] %v364
    %409 = vst [vmem:[#allocation2 + $0x58] sm:$0xff] %v366
    %410 = vst [vmem:[#allocation2 + $0x60] sm:$0xff] %v257
    %411 = vst [vmem:[#allocation2 + $0x68] sm:$0xff] %v259
    %412 = vst [vmem:[#allocation2 + $0x70] sm:$0xff] %v370
    %413 = vst [vmem:[#allocation2 + $0x78] sm:$0xff] %v372
    %414 = vst [vmem:[#allocation2 + $0x80] sm:$0xff] %v263
    %415 = vst [vmem:[#allocation2 + $0x88] sm:$0xff] %v265
    %416 = vst [vmem:[#allocation2 + $0x90] sm:$0xff] %v376
    %417 = vst [vmem:[#allocation2 + $0x98] sm:$0xff] %v378
    %418 = vst [vmem:[#allocation2 + $0xa0] sm:$0xff] %v269
    %419 = vst [vmem:[#allocation2 + $0xa8] sm:$0xff] %v271
    %420 = vst [vmem:[#allocation2 + $0xb0] sm:$0xff] %v382
    %421 = vst [vmem:[#allocation2 + $0xb8] sm:$0xff] %v384
    %422 = vst [vmem:[#allocation2 + $0xc0] sm:$0xff] %v275
    %423 = vst [vmem:[#allocation2 + $0xc8] sm:$0xff] %v277
    %424 = vst [vmem:[#allocation2 + $0xd0] sm:$0xff] %v388
    %425 = vst [vmem:[#allocation2 + $0xd8] sm:$0xff] %v390
    %426 = vst [vmem:[#allocation2 + $0xe0] sm:$0xff] %v281
    %427 = vst [vmem:[#allocation2 + $0xe8] sm:$0xff] %v283
    %428 = vst [vmem:[#allocation2 + $0xf0] sm:$0xff] %v394
    %429 = vst [vmem:[#allocation2 + $0xf8] sm:$0xff] %v396
    %v430 = vld [vmem:[#allocation2] sm:$0xff]
    %v431 = vld [vmem:[#allocation2 + $0x8] sm:$0xff]
    %v432 = vld [vmem:[#allocation2 + $0x10] sm:$0xff]
    %v433 = vld [vmem:[#allocation2 + $0x18] sm:$0xff]
    %v434 = vld [vmem:[#allocation5] sm:$0xff]
    %v435 = vld [vmem:[#allocation5 + $0x8] sm:$0xff]
    %v436 = vld [vmem:[#allocation5 + $0x10] sm:$0xff]
    %v437 = vld [vmem:[#allocation5 + $0x18] sm:$0xff]
    %v438 = vld [vmem:[#allocation5 + $0x20] sm:$0xff]
    %v439 = vld [vmem:[#allocation5 + $0x28] sm:$0xff]
    %v440 = vld [vmem:[#allocation5 + $0x30] sm:$0xff]
    %v441 = vld [vmem:[#allocation5 + $0x38] sm:$0xff]
    %v442 = vld [vmem:[#allocation5 + $0x40] sm:$0xff]
    %v443 = vld [vmem:[#allocation5 + $0x48] sm:$0xff]
    %v444 = vld [vmem:[#allocation5 + $0x50] sm:$0xff]
    %v445 = vld [vmem:[#allocation5 + $0x58] sm:$0xff]
    %v446 = vld [vmem:[#allocation5 + $0x60] sm:$0xff]
    %v447 = vld [vmem:[#allocation5 + $0x68] sm:$0xff]
    %v448 = vld [vmem:[#allocation5 + $0x70] sm:$0xff]
    %v449 = vld [vmem:[#allocation5 + $0x78] sm:$0xff]
    %v450 = vld [vmem:[#allocation5 + $0x80] sm:$0xff]
    %v451 = vld [vmem:[#allocation5 + $0x88] sm:$0xff]
    %v452 = vld [vmem:[#allocation5 + $0x90] sm:$0xff]
    %v453 = vld [vmem:[#allocation5 + $0x98] sm:$0xff]
    %v454 = vld [vmem:[#allocation5 + $0xa0] sm:$0xff]
    %v455 = vld [vmem:[#allocation5 + $0xa8] sm:$0xff]
    %v456 = vld [vmem:[#allocation5 + $0xb0] sm:$0xff]
    %v457 = vld [vmem:[#allocation5 + $0xb8] sm:$0xff]
    %v458 = vld [vmem:[#allocation5 + $0xc0] sm:$0xff]
    %v459 = vld [vmem:[#allocation5 + $0xc8] sm:$0xff]
    %v460 = vld [vmem:[#allocation5 + $0xd0] sm:$0xff]
    %v461 = vld [vmem:[#allocation5 + $0xd8] sm:$0xff]
    %v462 = vld [vmem:[#allocation5 + $0xe0] sm:$0xff]
    %v463 = vld [vmem:[#allocation5 + $0xe8] sm:$0xff]
    %v464 = vld [vmem:[#allocation5 + $0xf0] sm:$0xff]
    %v465 = vld [vmem:[#allocation5 + $0xf8] sm:$0xff]
    %v466 = vld [vmem:[#allocation5 + $0x100] sm:$0xff]
    %v467 = vld [vmem:[#allocation5 + $0x108] sm:$0xff]
    %v468 = vld [vmem:[#allocation5 + $0x110] sm:$0xff]
    %v469 = vld [vmem:[#allocation5 + $0x118] sm:$0xff]
    %v470 = vld [vmem:[#allocation5 + $0x120] sm:$0xff]
    %v471 = vld [vmem:[#allocation5 + $0x128] sm:$0xff]
    %v472 = vld [vmem:[#allocation5 + $0x130] sm:$0xff]
    %v473 = vld [vmem:[#allocation5 + $0x138] sm:$0xff]
    %v474 = vld [vmem:[#allocation5 + $0x140] sm:$0xff]
    %v475 = vld [vmem:[#allocation5 + $0x148] sm:$0xff]
    %v476 = vld [vmem:[#allocation5 + $0x150] sm:$0xff]
    %v477 = vld [vmem:[#allocation5 + $0x158] sm:$0xff]
    %v478 = vld [vmem:[#allocation5 + $0x160] sm:$0xff]
    %v479 = vld [vmem:[#allocation5 + $0x168] sm:$0xff]
    %v480 = vld [vmem:[#allocation5 + $0x170] sm:$0xff]
    %v481 = vld [vmem:[#allocation5 + $0x178] sm:$0xff]
    %v482 = vld [vmem:[#allocation5 + $0x180] sm:$0xff]
    %v483 = vld [vmem:[#allocation5 + $0x188] sm:$0xff]
    %v484 = vld [vmem:[#allocation5 + $0x190] sm:$0xff]
    %v485 = vld [vmem:[#allocation5 + $0x198] sm:$0xff]
    %v486 = vld [vmem:[#allocation5 + $0x1a0] sm:$0xff]
    %v487 = vld [vmem:[#allocation5 + $0x1a8] sm:$0xff]
    %v488 = vld [vmem:[#allocation5 + $0x1b0] sm:$0xff]
    %v489 = vld [vmem:[#allocation5 + $0x1b8] sm:$0xff]
    %v490 = vld [vmem:[#allocation5 + $0x1c0] sm:$0xff]
    %v491 = vld [vmem:[#allocation5 + $0x1c8] sm:$0xff]
    %v492 = vld [vmem:[#allocation5 + $0x1d0] sm:$0xff]
    %v493 = vld [vmem:[#allocation5 + $0x1d8] sm:$0xff]
    %v494 = vld [vmem:[#allocation5 + $0x1e0] sm:$0xff]
    %v495 = vld [vmem:[#allocation5 + $0x1e8] sm:$0xff]
    %v496 = vld [vmem:[#allocation5 + $0x1f0] sm:$0xff]
    %v497 = vld [vmem:[#allocation5 + $0x1f8] sm:$0xff]
    %498 = vmatprep.subr.mxu0 %v435
    %499 = vmatpush1.msra.mxu0 %v434
    %500 = vmatprep.subr.mxu0 %v439
    %501 = vmatpush1.msra.mxu0 %v438
    %502 = vmatprep.subr.mxu0 %v443
    %503 = vmatpush1.msra.mxu0 %v442
    %504 = vmatprep.subr.mxu0 %v447
    %505 = vmatpush1.msra.mxu0 %v446
    %506 = vmatprep.subr.mxu0 %v451
    %507 = vmatpush1.msra.mxu0 %v450
    %508 = vmatprep.subr.mxu0 %v455
    %509 = vmatpush1.msra.mxu0 %v454
    %510 = vmatprep.subr.mxu0 %v459
    %511 = vmatpush1.msra.mxu0 %v458
    %512 = vmatprep.subr.mxu0 %v463
    %513 = vmatpush1.msra.mxu0 %v462
    %514 = vmatprep.subr.mxu0 %v467
    %515 = vmatpush1.msra.mxu0 %v466
    %516 = vmatprep.subr.mxu0 %v471
    %517 = vmatpush1.msra.mxu0 %v470
    %518 = vmatprep.subr.mxu0 %v475
    %519 = vmatpush1.msra.mxu0 %v474
    %520 = vmatprep.subr.mxu0 %v479
    %521 = vmatpush1.msra.mxu0 %v478
    %522 = vmatprep.subr.mxu0 %v483
    %523 = vmatpush1.msra.mxu0 %v482
    %524 = vmatprep.subr.mxu0 %v487
    %525 = vmatpush1.msra.mxu0 %v486
    %526 = vmatprep.subr.mxu0 %v491
    %527 = vmatpush1.msra.mxu0 %v490
    %528 = vmatprep.subr.mxu0 %v495
    %529 = vmatpush1.msra.mxu0 %v494
    %530 = vmatprep.subr.mxu0 0.0
    %531 = vmatpush1.msra.mxu0 0.0
    %532 = vmatprep.subr.mxu0 0.0
    %533 = vmatpush1.msra.mxu0 0.0
    %534 = vmatprep.subr.mxu0 0.0
    %535 = vmatpush1.msra.mxu0 0.0
    %536 = vmatprep.subr.mxu0 0.0
    %537 = vmatpush1.msra.mxu0 0.0
    %538 = vmatprep.subr.mxu0 0.0
    %539 = vmatpush1.msra.mxu0 0.0
    %540 = vmatprep.subr.mxu0 0.0
    %541 = vmatpush1.msra.mxu0 0.0
    %542 = vmatprep.subr.mxu0 0.0
    %543 = vmatpush1.msra.mxu0 0.0
    %544 = vmatprep.subr.mxu0 0.0
    %545 = vmatpush1.msra.mxu0 0.0
    %546 = vmatprep.subr.mxu0 0.0
    %547 = vmatpush1.msra.mxu0 0.0
    %548 = vmatprep.subr.mxu0 0.0
    %549 = vmatpush1.msra.mxu0 0.0
    %550 = vmatprep.subr.mxu0 0.0
    %551 = vmatpush1.msra.mxu0 0.0
    %552 = vmatprep.subr.mxu0 0.0
    %553 = vmatpush1.msra.mxu0 0.0
    %554 = vmatprep.subr.mxu0 0.0
    %555 = vmatpush1.msra.mxu0 0.0
    %556 = vmatprep.subr.mxu0 0.0
    %557 = vmatpush1.msra.mxu0 0.0
    %558 = vmatprep.subr.mxu0 0.0
    %559 = vmatpush1.msra.mxu0 0.0
    %560 = vmatprep.subr.mxu0 0.0
    %561 = vmatpush1.msra.mxu0 0.0
    %562 = vmatprep.mubr.f32.mxu0 0.0
    %563 = vmatmul.mubr.f32.gmra.mrb[0].mxu0 0.0
    %v564 = vpop.f32.mrb[0].mxu0
    %v565 = vadd.f32 0.0, %v564
    %v566 = vpop.f32.mrb[0].mxu0
    %v567 = vadd.f32 0.0, %v566
    %568 = vdwg.mxu0
    %569 = vmatprep.subr.mxu0 %v437
    %570 = vmatpush1.msra.mxu0 %v436
    %571 = vmatprep.subr.mxu0 %v441
    %572 = vmatpush1.msra.mxu0 %v440
    %573 = vmatprep.subr.mxu0 %v445
    %574 = vmatpush1.msra.mxu0 %v444
    %575 = vmatprep.subr.mxu0 %v449
    %576 = vmatpush1.msra.mxu0 %v448
    %577 = vmatprep.subr.mxu0 %v453
    %578 = vmatpush1.msra.mxu0 %v452
    %579 = vmatprep.subr.mxu0 %v457
    %580 = vmatpush1.msra.mxu0 %v456
    %581 = vmatprep.subr.mxu0 %v461
    %582 = vmatpush1.msra.mxu0 %v460
    %583 = vmatprep.subr.mxu0 %v465
    %584 = vmatpush1.msra.mxu0 %v464
    %585 = vmatprep.subr.mxu0 %v469
    %586 = vmatpush1.msra.mxu0 %v468
    %587 = vmatprep.subr.mxu0 %v473
    %588 = vmatpush1.msra.mxu0 %v472
    %589 = vmatprep.subr.mxu0 %v477
    %590 = vmatpush1.msra.mxu0 %v476
    %591 = vmatprep.subr.mxu0 %v481
    %592 = vmatpush1.msra.mxu0 %v480
    %593 = vmatprep.subr.mxu0 %v485
    %594 = vmatpush1.msra.mxu0 %v484
    %595 = vmatprep.subr.mxu0 %v489
    %596 = vmatpush1.msra.mxu0 %v488
    %597 = vmatprep.subr.mxu0 %v493
    %598 = vmatpush1.msra.mxu0 %v492
    %599 = vmatprep.subr.mxu0 %v497
    %600 = vmatpush1.msra.mxu0 %v496
    %601 = vmatprep.subr.mxu0 0.0
    %602 = vmatpush1.msra.mxu0 0.0
    %603 = vmatprep.subr.mxu0 0.0
    %604 = vmatpush1.msra.mxu0 0.0
    %605 = vmatprep.subr.mxu0 0.0
    %606 = vmatpush1.msra.mxu0 0.0
    %607 = vmatprep.subr.mxu0 0.0
    %608 = vmatpush1.msra.mxu0 0.0
    %609 = vmatprep.subr.mxu0 0.0
    %610 = vmatpush1.msra.mxu0 0.0
    %611 = vmatprep.subr.mxu0 0.0
    %612 = vmatpush1.msra.mxu0 0.0
    %613 = vmatprep.subr.mxu0 0.0
    %614 = vmatpush1.msra.mxu0 0.0
    %615 = vmatprep.subr.mxu0 0.0
    %616 = vmatpush1.msra.mxu0 0.0
    %617 = vmatprep.subr.mxu0 0.0
    %618 = vmatpush1.msra.mxu0 0.0
    %619 = vmatprep.subr.mxu0 0.0
    %620 = vmatpush1.msra.mxu0 0.0
    %621 = vmatprep.subr.mxu0 0.0
    %622 = vmatpush1.msra.mxu0 0.0
    %623 = vmatprep.subr.mxu0 0.0
    %624 = vmatpush1.msra.mxu0 0.0
    %625 = vmatprep.subr.mxu0 0.0
    %626 = vmatpush1.msra.mxu0 0.0
    %627 = vmatprep.subr.mxu0 0.0
    %628 = vmatpush1.msra.mxu0 0.0
    %629 = vmatprep.subr.mxu0 0.0
    %630 = vmatpush1.msra.mxu0 0.0
    %631 = vmatprep.subr.mxu0 0.0
    %632 = vmatpush1.msra.mxu0 0.0
    %633 = vmatprep.mubr.f32.mxu0 0.0
    %634 = vmatmul.mubr.f32.gmra.mrb[0].mxu0 0.0
    %v635 = vpop.f32.mrb[0].mxu0
    %v636 = vadd.f32 0.0, %v635
    %v637 = vpop.f32.mrb[0].mxu0
    %v638 = vadd.f32 0.0, %v637
    %639 = vdwg.mxu0
    %v640 = vadd.f32 %v430, %v565
    %v641 = vadd.f32 %v431, %v567
    %v642 = vadd.f32 %v432, %v636
    %v643 = vadd.f32 %v433, %v638
    %v644 = vxor.u32 %v640, 2147483648
    %v645 = vxor.u32 %v641, 2147483648
    %v646 = vxor.u32 %v642, 2147483648
    %v647 = vmul.f32 %v644, 1.442695
    %v648 = vpow.pop %v647
    %v649 = vmul.f32 %v645, 1.442695
    %v650 = vpow.pop %v649
    %v651 = vmul.f32 %v646, 1.442695
    %v652 = vpow.pop %v651
    %v653 = vadd.f32 %v648, 1.0
    %v654 = vadd.f32 %v650, 1.0
    %v655 = vadd.f32 %v652, 1.0
    %v656 = vrcp.pop %v653
    %v657 = vmul.f32 1.0, %v656
    %v658 = vrcp.pop %v654
    %v659 = vmul.f32 1.0, %v658
    %v660 = vrcp.pop %v655
    %v661 = vmul.f32 1.0, %v660
    %v662 = vtanh.pop %v643
    %v663 = vmul.f32 %v659, 0.0
    %v664 = vmul.f32 %v657, %v662
    %v665 = vadd.f32 %v663, %v664
    %v666 = vtanh.pop %v665
    %v667 = vmul.f32 %v661, %v666
    %v668 = vld [vmem:[#allocation2 + $0x20] sm:$0xff]
    %v669 = vld [vmem:[#allocation2 + $0x28] sm:$0xff]
    %v670 = vld [vmem:[#allocation2 + $0x30] sm:$0xff]
    %v671 = vld [vmem:[#allocation2 + $0x38] sm:$0xff]
    %672 = vmatprep.subr.mxu0 %v435
    %673 = vmatpush1.msra.mxu0 %v434
    %674 = vmatprep.subr.mxu0 %v439
    %675 = vmatpush1.msra.mxu0 %v438
    %676 = vmatprep.subr.mxu0 %v443
    %677 = vmatpush1.msra.mxu0 %v442
    %678 = vmatprep.subr.mxu0 %v447
    %679 = vmatpush1.msra.mxu0 %v446
    %680 = vmatprep.subr.mxu0 %v451
    %681 = vmatpush1.msra.mxu0 %v450
    %682 = vmatprep.subr.mxu0 %v455
    %683 = vmatpush1.msra.mxu0 %v454
    %684 = vmatprep.subr.mxu0 %v459
    %685 = vmatpush1.msra.mxu0 %v458
    %686 = vmatprep.subr.mxu0 %v463
    %687 = vmatpush1.msra.mxu0 %v462
    %688 = vmatprep.subr.mxu0 %v467
    %689 = vmatpush1.msra.mxu0 %v466
    %690 = vmatprep.subr.mxu0 %v471
    %691 = vmatpush1.msra.mxu0 %v470
    %692 = vmatprep.subr.mxu0 %v475
    %693 = vmatpush1.msra.mxu0 %v474
    %694 = vmatprep.subr.mxu0 %v479
    %695 = vmatpush1.msra.mxu0 %v478
    %696 = vmatprep.subr.mxu0 %v483
    %697 = vmatpush1.msra.mxu0 %v482
    %698 = vmatprep.subr.mxu0 %v487
    %699 = vmatpush1.msra.mxu0 %v486
    %700 = vmatprep.subr.mxu0 %v491
    %701 = vmatpush1.msra.mxu0 %v490
    %702 = vmatprep.subr.mxu0 %v495
    %703 = vmatpush1.msra.mxu0 %v494
    %704 = vmatprep.subr.mxu0 0.0
    %705 = vmatpush1.msra.mxu0 0.0
    %706 = vmatprep.subr.mxu0 0.0
    %707 = vmatpush1.msra.mxu0 0.0
    %708 = vmatprep.subr.mxu0 0.0
    %709 = vmatpush1.msra.mxu0 0.0
    %710 = vmatprep.subr.mxu0 0.0
    %711 = vmatpush1.msra.mxu0 0.0
    %712 = vmatprep.subr.mxu0 0.0
    %713 = vmatpush1.msra.mxu0 0.0
    %714 = vmatprep.subr.mxu0 0.0
    %715 = vmatpush1.msra.mxu0 0.0
    %716 = vmatprep.subr.mxu0 0.0
    %717 = vmatpush1.msra.mxu0 0.0
    %718 = vmatprep.subr.mxu0 0.0
    %719 = vmatpush1.msra.mxu0 0.0
    %720 = vmatprep.subr.mxu0 0.0
    %721 = vmatpush1.msra.mxu0 0.0
    %722 = vmatprep.subr.mxu0 0.0
    %723 = vmatpush1.msra.mxu0 0.0
    %724 = vmatprep.subr.mxu0 0.0
    %725 = vmatpush1.msra.mxu0 0.0
    %726 = vmatprep.subr.mxu0 0.0
    %727 = vmatpush1.msra.mxu0 0.0
    %728 = vmatprep.subr.mxu0 0.0
    %729 = vmatpush1.msra.mxu0 0.0
    %730 = vmatprep.subr.mxu0 0.0
    %731 = vmatpush1.msra.mxu0 0.0
    %732 = vmatprep.subr.mxu0 0.0
    %733 = vmatpush1.msra.mxu0 0.0
    %734 = vmatprep.subr.mxu0 0.0
    %735 = vmatpush1.msra.mxu0 0.0
    %736 = vmatprep.mubr.f32.mxu0 0.0
    %737 = vmatmul.mubr.f32.gmra.mrb[0].mxu0 %v667
    %v738 = vpop.f32.mrb[0].mxu0
    %v739 = vadd.f32 0.0, %v738
    %v740 = vpop.f32.mrb[0].mxu0
    %v741 = vadd.f32 0.0, %v740
    %742 = vdwg.mxu0
    %743 = vmatprep.subr.mxu0 %v437
    %744 = vmatpush1.msra.mxu0 %v436
    %745 = vmatprep.subr.mxu0 %v441
    %746 = vmatpush1.msra.mxu0 %v440
    %747 = vmatprep.subr.mxu0 %v445
    %748 = vmatpush1.msra.mxu0 %v444
    %749 = vmatprep.subr.mxu0 %v449
    %750 = vmatpush1.msra.mxu0 %v448
    %751 = vmatprep.subr.mxu0 %v453
    %752 = vmatpush1.msra.mxu0 %v452
    %753 = vmatprep.subr.mxu0 %v457
    %754 = vmatpush1.msra.mxu0 %v456
    %755 = vmatprep.subr.mxu0 %v461
    %756 = vmatpush1.msra.mxu0 %v460
    %757 = vmatprep.subr.mxu0 %v465
    %758 = vmatpush1.msra.mxu0 %v464
    %759 = vmatprep.subr.mxu0 %v469
    %760 = vmatpush1.msra.mxu0 %v468
    %761 = vmatprep.subr.mxu0 %v473
    %762 = vmatpush1.msra.mxu0 %v472
    %763 = vmatprep.subr.mxu0 %v477
    %764 = vmatpush1.msra.mxu0 %v476
    %765 = vmatprep.subr.mxu0 %v481
    %766 = vmatpush1.msra.mxu0 %v480
    %767 = vmatprep.subr.mxu0 %v485
    %768 = vmatpush1.msra.mxu0 %v484
    %769 = vmatprep.subr.mxu0 %v489
    %770 = vmatpush1.msra.mxu0 %v488
    %771 = vmatprep.subr.mxu0 %v493
    %772 = vmatpush1.msra.mxu0 %v492
    %773 = vmatprep.subr.mxu0 %v497
    %774 = vmatpush1.msra.mxu0 %v496
    %775 = vmatprep.subr.mxu0 0.0
    %776 = vmatpush1.msra.mxu0 0.0
    %777 = vmatprep.subr.mxu0 0.0
    %778 = vmatpush1.msra.mxu0 0.0
    %779 = vmatprep.subr.mxu0 0.0
    %780 = vmatpush1.msra.mxu0 0.0
    %781 = vmatprep.subr.mxu0 0.0
    %782 = vmatpush1.msra.mxu0 0.0
    %783 = vmatprep.subr.mxu0 0.0
    %784 = vmatpush1.msra.mxu0 0.0
    %785 = vmatprep.subr.mxu0 0.0
    %786 = vmatpush1.msra.mxu0 0.0
    %787 = vmatprep.subr.mxu0 0.0
    %788 = vmatpush1.msra.mxu0 0.0
    %789 = vmatprep.subr.mxu0 0.0
    %790 = vmatpush1.msra.mxu0 0.0
    %791 = vmatprep.subr.mxu0 0.0
    %792 = vmatpush1.msra.mxu0 0.0
    %793 = vmatprep.subr.mxu0 0.0
    %794 = vmatpush1.msra.mxu0 0.0
    %795 = vmatprep.subr.mxu0 0.0
    %796 = vmatpush1.msra.mxu0 0.0
    %797 = vmatprep.subr.mxu0 0.0
    %798 = vmatpush1.msra.mxu0 0.0
    %799 = vmatprep.subr.mxu0 0.0
    %800 = vmatpush1.msra.mxu0 0.0
    %801 = vmatprep.subr.mxu0 0.0
    %802 = vmatpush1.msra.mxu0 0.0
    %803 = vmatprep.subr.mxu0 0.0
    %804 = vmatpush1.msra.mxu0 0.0
    %805 = vmatprep.subr.mxu0 0.0
    %806 = vmatpush1.msra.mxu0 0.0
    %807 = vmatprep.mubr.f32.mxu0 0.0
    %808 = vmatmul.mubr.f32.gmra.mrb[0].mxu0 %v667
    %v809 = vpop.f32.mrb[0].mxu0
    %v810 = vadd.f32 0.0, %v809
    %v811 = vpop.f32.mrb[0].mxu0
    %v812 = vadd.f32 0.0, %v811
    %813 = vdwg.mxu0
    %v814 = vadd.f32 %v668, %v739
    %v815 = vadd.f32 %v669, %v741
    %v816 = vadd.f32 %v670, %v810
    %v817 = vadd.f32 %v671, %v812
    %v818 = vxor.u32 %v814, 2147483648
    %v819 = vxor.u32 %v815, 2147483648
    %v820 = vxor.u32 %v816, 2147483648
    %v821 = vmul.f32 %v818, 1.442695
    %v822 = vpow.pop %v821
    %v823 = vmul.f32 %v819, 1.442695
    %v824 = vpow.pop %v823
    %v825 = vmul.f32 %v820, 1.442695
    %v826 = vpow.pop %v825
    %v827 = vadd.f32 %v822, 1.0
    %v828 = vadd.f32 %v824, 1.0
    %v829 = vadd.f32 %v826, 1.0
    %v830 = vrcp.pop %v827
    %v831 = vmul.f32 1.0, %v830
    %v832 = vrcp.pop %v828
    %v833 = vmul.f32 1.0, %v832
    %v834 = vrcp.pop %v829
    %v835 = vmul.f32 1.0, %v834
    %v836 = vtanh.pop %v817
    %v837 = vmul.f32 %v833, %v665
    %v838 = vmul.f32 %v831, %v836
    %v839 = vadd.f32 %v837, %v838
    %v840 = vtanh.pop %v839
    %v841 = vmul.f32 %v835, %v840
    %v842 = vld [vmem:[#allocation2 + $0x40] sm:$0xff]
    %v843 = vld [vmem:[#allocation2 + $0x48] sm:$0xff]
    %v844 = vld [vmem:[#allocation2 + $0x50] sm:$0xff]
    %v845 = vld [vmem:[#allocation2 + $0x58] sm:$0xff]
    %846 = vmatprep.subr.mxu0 %v435
    %847 = vmatpush1.msra.mxu0 %v434
    %848 = vmatprep.subr.mxu0 %v439
    %849 = vmatpush1.msra.mxu0 %v438
    %850 = vmatprep.subr.mxu0 %v443
    %851 = vmatpush1.msra.mxu0 %v442
    %852 = vmatprep.subr.mxu0 %v447
    %853 = vmatpush1.msra.mxu0 %v446
    %854 = vmatprep.subr.mxu0 %v451
    %855 = vmatpush1.msra.mxu0 %v450
    %856 = vmatprep.subr.mxu0 %v455
    %857 = vmatpush1.msra.mxu0 %v454
    %858 = vmatprep.subr.mxu0 %v459
    %859 = vmatpush1.msra.mxu0 %v458
    %860 = vmatprep.subr.mxu0 %v463
    %861 = vmatpush1.msra.mxu0 %v462
    %862 = vmatprep.subr.mxu0 %v467
    %863 = vmatpush1.msra.mxu0 %v466
    %864 = vmatprep.subr.mxu0 %v471
    %865 = vmatpush1.msra.mxu0 %v470
    %866 = vmatprep.subr.mxu0 %v475
    %867 = vmatpush1.msra.mxu0 %v474
    %868 = vmatprep.subr.mxu0 %v479
    %869 = vmatpush1.msra.mxu0 %v478
    %870 = vmatprep.subr.mxu0 %v483
    %871 = vmatpush1.msra.mxu0 %v482
    %872 = vmatprep.subr.mxu0 %v487
    %873 = vmatpush1.msra.mxu0 %v486
    %874 = vmatprep.subr.mxu0 %v491
    %875 = vmatpush1.msra.mxu0 %v490
    %876 = vmatprep.subr.mxu0 %v495
    %877 = vmatpush1.msra.mxu0 %v494
    %878 = vmatprep.subr.mxu0 0.0
    %879 = vmatpush1.msra.mxu0 0.0
    %880 = vmatprep.subr.mxu0 0.0
    %881 = vmatpush1.msra.mxu0 0.0
    %882 = vmatprep.subr.mxu0 0.0
    %883 = vmatpush1.msra.mxu0 0.0
    %884 = vmatprep.subr.mxu0 0.0
    %885 = vmatpush1.msra.mxu0 0.0
    %886 = vmatprep.subr.mxu0 0.0
    %887 = vmatpush1.msra.mxu0 0.0
    %888 = vmatprep.subr.mxu0 0.0
    %889 = vmatpush1.msra.mxu0 0.0
    %890 = vmatprep.subr.mxu0 0.0
    %891 = vmatpush1.msra.mxu0 0.0
    %892 = vmatprep.subr.mxu0 0.0
    %893 = vmatpush1.msra.mxu0 0.0
    %894 = vmatprep.subr.mxu0 0.0
    %895 = vmatpush1.msra.mxu0 0.0
    %896 = vmatprep.subr.mxu0 0.0
    %897 = vmatpush1.msra.mxu0 0.0
    %898 = vmatprep.subr.mxu0 0.0
    %899 = vmatpush1.msra.mxu0 0.0
    %900 = vmatprep.subr.mxu0 0.0
    %901 = vmatpush1.msra.mxu0 0.0
    %902 = vmatprep.subr.mxu0 0.0
    %903 = vmatpush1.msra.mxu0 0.0
    %904 = vmatprep.subr.mxu0 0.0
    %905 = vmatpush1.msra.mxu0 0.0
    %906 = vmatprep.subr.mxu0 0.0
    %907 = vmatpush1.msra.mxu0 0.0
    %908 = vmatprep.subr.mxu0 0.0
    %909 = vmatpush1.msra.mxu0 0.0
    %910 = vmatprep.mubr.f32.mxu0 0.0
    %911 = vmatmul.mubr.f32.gmra.mrb[0].mxu0 %v841
    %v912 = vpop.f32.mrb[0].mxu0
    %v913 = vadd.f32 0.0, %v912
    %v914 = vpop.f32.mrb[0].mxu0
    %v915 = vadd.f32 0.0, %v914
    %916 = vdwg.mxu0
    %917 = vmatprep.subr.mxu0 %v437
    %918 = vmatpush1.msra.mxu0 %v436
    %919 = vmatprep.subr.mxu0 %v441
    %920 = vmatpush1.msra.mxu0 %v440
    %921 = vmatprep.subr.mxu0 %v445
    %922 = vmatpush1.msra.mxu0 %v444
    %923 = vmatprep.subr.mxu0 %v449
    %924 = vmatpush1.msra.mxu0 %v448
    %925 = vmatprep.subr.mxu0 %v453
    %926 = vmatpush1.msra.mxu0 %v452
    %927 = vmatprep.subr.mxu0 %v457
    %928 = vmatpush1.msra.mxu0 %v456
    %929 = vmatprep.subr.mxu0 %v461
    %930 = vmatpush1.msra.mxu0 %v460
    %931 = vmatprep.subr.mxu0 %v465
    %932 = vmatpush1.msra.mxu0 %v464
    %933 = vmatprep.subr.mxu0 %v469
    %934 = vmatpush1.msra.mxu0 %v468
    %935 = vmatprep.subr.mxu0 %v473
    %936 = vmatpush1.msra.mxu0 %v472
    %937 = vmatprep.subr.mxu0 %v477
    %938 = vmatpush1.msra.mxu0 %v476
    %939 = vmatprep.subr.mxu0 %v481
    %940 = vmatpush1.msra.mxu0 %v480
    %941 = vmatprep.subr.mxu0 %v485
    %942 = vmatpush1.msra.mxu0 %v484
    %943 = vmatprep.subr.mxu0 %v489
    %944 = vmatpush1.msra.mxu0 %v488
    %945 = vmatprep.subr.mxu0 %v493
    %946 = vmatpush1.msra.mxu0 %v492
    %947 = vmatprep.subr.mxu0 %v497
    %948 = vmatpush1.msra.mxu0 %v496
    %949 = vmatprep.subr.mxu0 0.0
    %950 = vmatpush1.msra.mxu0 0.0
    %951 = vmatprep.subr.mxu0 0.0
    %952 = vmatpush1.msra.mxu0 0.0
    %953 = vmatprep.subr.mxu0 0.0
    %954 = vmatpush1.msra.mxu0 0.0
    %955 = vmatprep.subr.mxu0 0.0
    %956 = vmatpush1.msra.mxu0 0.0
    %957 = vmatprep.subr.mxu0 0.0
    %958 = vmatpush1.msra.mxu0 0.0
    %959 = vmatprep.subr.mxu0 0.0
    %960 = vmatpush1.msra.mxu0 0.0
    %961 = vmatprep.subr.mxu0 0.0
    %962 = vmatpush1.msra.mxu0 0.0
    %963 = vmatprep.subr.mxu0 0.0
    %964 = vmatpush1.msra.mxu0 0.0
    %965 = vmatprep.subr.mxu0 0.0
    %966 = vmatpush1.msra.mxu0 0.0
    %967 = vmatprep.subr.mxu0 0.0
    %968 = vmatpush1.msra.mxu0 0.0
    %969 = vmatprep.subr.mxu0 0.0
    %970 = vmatpush1.msra.mxu0 0.0
    %971 = vmatprep.subr.mxu0 0.0
    %972 = vmatpush1.msra.mxu0 0.0
    %973 = vmatprep.subr.mxu0 0.0
    %974 = vmatpush1.msra.mxu0 0.0
    %975 = vmatprep.subr.mxu0 0.0
    %976 = vmatpush1.msra.mxu0 0.0
    %977 = vmatprep.subr.mxu0 0.0
    %978 = vmatpush1.msra.mxu0 0.0
    %979 = vmatprep.subr.mxu0 0.0
    %980 = vmatpush1.msra.mxu0 0.0
    %981 = vmatprep.mubr.f32.mxu0 0.0
    %982 = vmatmul.mubr.f32.gmra.mrb[0].mxu0 %v841
    %v983 = vpop.f32.mrb[0].mxu0
    %v984 = vadd.f32 0.0, %v983
    %v985 = vpop.f32.mrb[0].mxu0
    %v986 = vadd.f32 0.0, %v985
    %987 = vdwg.mxu0
    %v988 = vadd.f32 %v842, %v913
    %v989 = vadd.f32 %v843, %v915
    %v990 = vadd.f32 %v844, %v984
    %v991 = vadd.f32 %v845, %v986
    %v992 = vxor.u32 %v988, 2147483648
    %v993 = vxor.u32 %v989, 2147483648
    %v994 = vxor.u32 %v990, 2147483648
    %v995 = vmul.f32 %v992, 1.442695
    %v996 = vpow.pop %v995
    %v997 = vmul.f32 %v993, 1.442695
    %v998 = vpow.pop %v997
    %v999 = vmul.f32 %v994, 1.442695
    %v1000 = vpow.pop %v999
    %v1001 = vadd.f32 %v996, 1.0
    %v1002 = vadd.f32 %v998, 1.0
    %v1003 = vadd.f32 %v1000, 1.0
    %v1004 = vrcp.pop %v1001
    %v1005 = vmul.f32 1.0, %v1004
    %v1006 = vrcp.pop %v1002
    %v1007 = vmul.f32 1.0, %v1006
    %v1008 = vrcp.pop %v1003
    %v1009 = vmul.f32 1.0, %v1008
    %v1010 = vtanh.pop %v991
    %v1011 = vmul.f32 %v1007, %v839
    %v1012 = vmul.f32 %v1005, %v1010
    %v1013 = vadd.f32 %v1011, %v1012
    %v1014 = vtanh.pop %v1013
    %v1015 = vmul.f32 %v1009, %v1014
    %v1016 = vld [vmem:[#allocation2 + $0x60] sm:$0xff]
    %v1017 = vld [vmem:[#allocation2 + $0x68] sm:$0xff]
    %v1018 = vld [vmem:[#allocation2 + $0x70] sm:$0xff]
    %v1019 = vld [vmem:[#allocation2 + $0x78] sm:$0xff]
    %1020 = vmatprep.subr.mxu0 %v435
    %1021 = vmatpush1.msra.mxu0 %v434
    %1022 = vmatprep.subr.mxu0 %v439
    %1023 = vmatpush1.msra.mxu0 %v438
    %1024 = vmatprep.subr.mxu0 %v443
    %1025 = vmatpush1.msra.mxu0 %v442
    %1026 = vmatprep.subr.mxu0 %v447
    %1027 = vmatpush1.msra.mxu0 %v446
    %1028 = vmatprep.subr.mxu0 %v451
    %1029 = vmatpush1.msra.mxu0 %v450
    %1030 = vmatprep.subr.mxu0 %v455
    %1031 = vmatpush1.msra.mxu0 %v454
    %1032 = vmatprep.subr.mxu0 %v459
    %1033 = vmatpush1.msra.mxu0 %v458
    %1034 = vmatprep.subr.mxu0 %v463
    %1035 = vmatpush1.msra.mxu0 %v462
    %1036 = vmatprep.subr.mxu0 %v467
    %1037 = vmatpush1.msra.mxu0 %v466
    %1038 = vmatprep.subr.mxu0 %v471
    %1039 = vmatpush1.msra.mxu0 %v470
    %1040 = vmatprep.subr.mxu0 %v475
    %1041 = vmatpush1.msra.mxu0 %v474
    %1042 = vmatprep.subr.mxu0 %v479
    %1043 = vmatpush1.msra.mxu0 %v478
    %1044 = vmatprep.subr.mxu0 %v483
    %1045 = vmatpush1.msra.mxu0 %v482
    %1046 = vmatprep.subr.mxu0 %v487
    %1047 = vmatpush1.msra.mxu0 %v486
    %1048 = vmatprep.subr.mxu0 %v491
    %1049 = vmatpush1.msra.mxu0 %v490
    %1050 = vmatprep.subr.mxu0 %v495
    %1051 = vmatpush1.msra.mxu0 %v494
    %1052 = vmatprep.subr.mxu0 0.0
    %1053 = vmatpush1.msra.mxu0 0.0
    %1054 = vmatprep.subr.mxu0 0.0
    %1055 = vmatpush1.msra.mxu0 0.0
    %1056 = vmatprep.subr.mxu0 0.0
    %1057 = vmatpush1.msra.mxu0 0.0
    %1058 = vmatprep.subr.mxu0 0.0
    %1059 = vmatpush1.msra.mxu0 0.0
    %1060 = vmatprep.subr.mxu0 0.0
    %1061 = vmatpush1.msra.mxu0 0.0
    %1062 = vmatprep.subr.mxu0 0.0
    %1063 = vmatpush1.msra.mxu0 0.0
    %1064 = vmatprep.subr.mxu0 0.0
    %1065 = vmatpush1.msra.mxu0 0.0
    %1066 = vmatprep.subr.mxu0 0.0
    %1067 = vmatpush1.msra.mxu0 0.0
    %1068 = vmatprep.subr.mxu0 0.0
    %1069 = vmatpush1.msra.mxu0 0.0
    %1070 = vmatprep.subr.mxu0 0.0
    %1071 = vmatpush1.msra.mxu0 0.0
    %1072 = vmatprep.subr.mxu0 0.0
    %1073 = vmatpush1.msra.mxu0 0.0
    %1074 = vmatprep.subr.mxu0 0.0
    %1075 = vmatpush1.msra.mxu0 0.0
    %1076 = vmatprep.subr.mxu0 0.0
    %1077 = vmatpush1.msra.mxu0 0.0
    %1078 = vmatprep.subr.mxu0 0.0
    %1079 = vmatpush1.msra.mxu0 0.0
    %1080 = vmatprep.subr.mxu0 0.0
    %1081 = vmatpush1.msra.mxu0 0.0
    %1082 = vmatprep.subr.mxu0 0.0
    %1083 = vmatpush1.msra.mxu0 0.0
    %1084 = vmatprep.mubr.f32.mxu0 0.0
    %1085 = vmatmul.mubr.f32.gmra.mrb[0].mxu0 %v1015
    %v1086 = vpop.f32.mrb[0].mxu0
    %v1087 = vadd.f32 0.0, %v1086
    %v1088 = vpop.f32.mrb[0].mxu0
    %v1089 = vadd.f32 0.0, %v1088
    %1090 = vdwg.mxu0
    %1091 = vmatprep.subr.mxu0 %v437
    %1092 = vmatpush1.msra.mxu0 %v436
    %1093 = vmatprep.subr.mxu0 %v441
    %1094 = vmatpush1.msra.mxu0 %v440
    %1095 = vmatprep.subr.mxu0 %v445
    %1096 = vmatpush1.msra.mxu0 %v444
    %1097 = vmatprep.subr.mxu0 %v449
    %1098 = vmatpush1.msra.mxu0 %v448
    %1099 = vmatprep.subr.mxu0 %v453
    %1100 = vmatpush1.msra.mxu0 %v452
    %1101 = vmatprep.subr.mxu0 %v457
    %1102 = vmatpush1.msra.mxu0 %v456
    %1103 = vmatprep.subr.mxu0 %v461
    %1104 = vmatpush1.msra.mxu0 %v460
    %1105 = vmatprep.subr.mxu0 %v465
    %1106 = vmatpush1.msra.mxu0 %v464
    %1107 = vmatprep.subr.mxu0 %v469
    %1108 = vmatpush1.msra.mxu0 %v468
    %1109 = vmatprep.subr.mxu0 %v473
    %1110 = vmatpush1.msra.mxu0 %v472
    %1111 = vmatprep.subr.mxu0 %v477
    %1112 = vmatpush1.msra.mxu0 %v476
    %1113 = vmatprep.subr.mxu0 %v481
    %1114 = vmatpush1.msra.mxu0 %v480
    %1115 = vmatprep.subr.mxu0 %v485
    %1116 = vmatpush1.msra.mxu0 %v484
    %1117 = vmatprep.subr.mxu0 %v489
    %1118 = vmatpush1.msra.mxu0 %v488
    %1119 = vmatprep.subr.mxu0 %v493
    %1120 = vmatpush1.msra.mxu0 %v492
    %1121 = vmatprep.subr.mxu0 %v497
    %1122 = vmatpush1.msra.mxu0 %v496
    %1123 = vmatprep.subr.mxu0 0.0
    %1124 = vmatpush1.msra.mxu0 0.0
    %1125 = vmatprep.subr.mxu0 0.0
    %1126 = vmatpush1.msra.mxu0 0.0
    %1127 = vmatprep.subr.mxu0 0.0
    %1128 = vmatpush1.msra.mxu0 0.0
    %1129 = vmatprep.subr.mxu0 0.0
    %1130 = vmatpush1.msra.mxu0 0.0
    %1131 = vmatprep.subr.mxu0 0.0
    %1132 = vmatpush1.msra.mxu0 0.0
    %1133 = vmatprep.subr.mxu0 0.0
    %1134 = vmatpush1.msra.mxu0 0.0
    %1135 = vmatprep.subr.mxu0 0.0
    %1136 = vmatpush1.msra.mxu0 0.0
    %1137 = vmatprep.subr.mxu0 0.0
    %1138 = vmatpush1.msra.mxu0 0.0
    %1139 = vmatprep.subr.mxu0 0.0
    %1140 = vmatpush1.msra.mxu0 0.0
    %1141 = vmatprep.subr.mxu0 0.0
    %1142 = vmatpush1.msra.mxu0 0.0
    %1143 = vmatprep.subr.mxu0 0.0
    %1144 = vmatpush1.msra.mxu0 0.0
    %1145 = vmatprep.subr.mxu0 0.0
    %1146 = vmatpush1.msra.mxu0 0.0
    %1147 = vmatprep.subr.mxu0 0.0
    %1148 = vmatpush1.msra.mxu0 0.0
    %1149 = vmatprep.subr.mxu0 0.0
    %1150 = vmatpush1.msra.mxu0 0.0
    %1151 = vmatprep.subr.mxu0 0.0
    %1152 = vmatpush1.msra.mxu0 0.0
    %1153 = vmatprep.subr.mxu0 0.0
    %1154 = vmatpush1.msra.mxu0 0.0
    %1155 = vmatprep.mubr.f32.mxu0 0.0
    %1156 = vmatmul.mubr.f32.gmra.mrb[0].mxu0 %v1015
    %v1157 = vpop.f32.mrb[0].mxu0
    %v1158 = vadd.f32 0.0, %v1157
    %v1159 = vpop.f32.mrb[0].mxu0
    %v1160 = vadd.f32 0.0, %v1159
    %1161 = vdwg.mxu0
    %v1162 = vadd.f32 %v1016, %v1087
    %v1163 = vadd.f32 %v1017, %v1089
    %v1164 = vadd.f32 %v1018, %v1158
    %v1165 = vadd.f32 %v1019, %v1160
    %v1166 = vxor.u32 %v1162, 2147483648
    %v1167 = vxor.u32 %v1163, 2147483648
    %v1168 = vxor.u32 %v1164, 2147483648
    %v1169 = vmul.f32 %v1166, 1.442695
    %v1170 = vpow.pop %v1169
    %v1171 = vmul.f32 %v1167, 1.442695
    %v1172 = vpow.pop %v1171
    %v1173 = vmul.f32 %v1168, 1.442695
    %v1174 = vpow.pop %v1173
    %v1175 = vadd.f32 %v1170, 1.0
    %v1176 = vadd.f32 %v1172, 1.0
    %v1177 = vadd.f32 %v1174, 1.0
    %v1178 = vrcp.pop %v1175
    %v1179 = vmul.f32 1.0, %v1178
    %v1180 = vrcp.pop %v1176
    %v1181 = vmul.f32 1.0, %v1180
    %v1182 = vrcp.pop %v1177
    %v1183 = vmul.f32 1.0, %v1182
    %v1184 = vtanh.pop %v1165
    %v1185 = vmul.f32 %v1181, %v1013
    %v1186 = vmul.f32 %v1179, %v1184
    %v1187 = vadd.f32 %v1185, %v1186
    %v1188 = vtanh.pop %v1187
    %v1189 = vmul.f32 %v1183, %v1188
    %v1190 = vld [vmem:[#allocation2 + $0x80] sm:$0xff]
    %v1191 = vld [vmem:[#allocation2 + $0x88] sm:$0xff]
    %v1192 = vld [vmem:[#allocation2 + $0x90] sm:$0xff]
    %v1193 = vld [vmem:[#allocation2 + $0x98] sm:$0xff]
    %1194 = vmatprep.subr.mxu0 %v435
    %1195 = vmatpush1.msra.mxu0 %v434
    %1196 = vmatprep.subr.mxu0 %v439
    %1197 = vmatpush1.msra.mxu0 %v438
    %1198 = vmatprep.subr.mxu0 %v443
    %1199 = vmatpush1.msra.mxu0 %v442
    %1200 = vmatprep.subr.mxu0 %v447
    %1201 = vmatpush1.msra.mxu0 %v446
    %1202 = vmatprep.subr.mxu0 %v451
    %1203 = vmatpush1.msra.mxu0 %v450
    %1204 = vmatprep.subr.mxu0 %v455
    %1205 = vmatpush1.msra.mxu0 %v454
    %1206 = vmatprep.subr.mxu0 %v459
    %1207 = vmatpush1.msra.mxu0 %v458
    %1208 = vmatprep.subr.mxu0 %v463
    %1209 = vmatpush1.msra.mxu0 %v462
    %1210 = vmatprep.subr.mxu0 %v467
    %1211 = vmatpush1.msra.mxu0 %v466
    %1212 = vmatprep.subr.mxu0 %v471
    %1213 = vmatpush1.msra.mxu0 %v470
    %1214 = vmatprep.subr.mxu0 %v475
    %1215 = vmatpush1.msra.mxu0 %v474
    %1216 = vmatprep.subr.mxu0 %v479
    %1217 = vmatpush1.msra.mxu0 %v478
    %1218 = vmatprep.subr.mxu0 %v483
    %1219 = vmatpush1.msra.mxu0 %v482
    %1220 = vmatprep.subr.mxu0 %v487
    %1221 = vmatpush1.msra.mxu0 %v486
    %1222 = vmatprep.subr.mxu0 %v491
    %1223 = vmatpush1.msra.mxu0 %v490
    %1224 = vmatprep.subr.mxu0 %v495
    %1225 = vmatpush1.msra.mxu0 %v494
    %1226 = vmatprep.subr.mxu0 0.0
    %1227 = vmatpush1.msra.mxu0 0.0
    %1228 = vmatprep.subr.mxu0 0.0
    %1229 = vmatpush1.msra.mxu0 0.0
    %1230 = vmatprep.subr.mxu0 0.0
    %1231 = vmatpush1.msra.mxu0 0.0
    %1232 = vmatprep.subr.mxu0 0.0
    %1233 = vmatpush1.msra.mxu0 0.0
    %1234 = vmatprep.subr.mxu0 0.0
    %1235 = vmatpush1.msra.mxu0 0.0
    %1236 = vmatprep.subr.mxu0 0.0
    %1237 = vmatpush1.msra.mxu0 0.0
    %1238 = vmatprep.subr.mxu0 0.0
    %1239 = vmatpush1.msra.mxu0 0.0
    %1240 = vmatprep.subr.mxu0 0.0
    %1241 = vmatpush1.msra.mxu0 0.0
    %1242 = vmatprep.subr.mxu0 0.0
    %1243 = vmatpush1.msra.mxu0 0.0
    %1244 = vmatprep.subr.mxu0 0.0
    %1245 = vmatpush1.msra.mxu0 0.0
    %1246 = vmatprep.subr.mxu0 0.0
    %1247 = vmatpush1.msra.mxu0 0.0
    %1248 = vmatprep.subr.mxu0 0.0
    %1249 = vmatpush1.msra.mxu0 0.0
    %1250 = vmatprep.subr.mxu0 0.0
    %1251 = vmatpush1.msra.mxu0 0.0
    %1252 = vmatprep.subr.mxu0 0.0
    %1253 = vmatpush1.msra.mxu0 0.0
    %1254 = vmatprep.subr.mxu0 0.0
    %1255 = vmatpush1.msra.mxu0 0.0
    %1256 = vmatprep.subr.mxu0 0.0
    %1257 = vmatpush1.msra.mxu0 0.0
    %1258 = vmatprep.mubr.f32.mxu0 0.0
    %1259 = vmatmul.mubr.f32.gmra.mrb[0].mxu0 %v1189
    %v1260 = vpop.f32.mrb[0].mxu0
    %v1261 = vadd.f32 0.0, %v1260
    %v1262 = vpop.f32.mrb[0].mxu0
    %v1263 = vadd.f32 0.0, %v1262
    %1264 = vdwg.mxu0
    %1265 = vmatprep.subr.mxu0 %v437
    %1266 = vmatpush1.msra.mxu0 %v436
    %1267 = vmatprep.subr.mxu0 %v441
    %1268 = vmatpush1.msra.mxu0 %v440
    %1269 = vmatprep.subr.mxu0 %v445
    %1270 = vmatpush1.msra.mxu0 %v444
    %1271 = vmatprep.subr.mxu0 %v449
    %1272 = vmatpush1.msra.mxu0 %v448
    %1273 = vmatprep.subr.mxu0 %v453
    %1274 = vmatpush1.msra.mxu0 %v452
    %1275 = vmatprep.subr.mxu0 %v457
    %1276 = vmatpush1.msra.mxu0 %v456
    %1277 = vmatprep.subr.mxu0 %v461
    %1278 = vmatpush1.msra.mxu0 %v460
    %1279 = vmatprep.subr.mxu0 %v465
    %1280 = vmatpush1.msra.mxu0 %v464
    %1281 = vmatprep.subr.mxu0 %v469
    %1282 = vmatpush1.msra.mxu0 %v468
    %1283 = vmatprep.subr.mxu0 %v473
    %1284 = vmatpush1.msra.mxu0 %v472
    %1285 = vmatprep.subr.mxu0 %v477
    %1286 = vmatpush1.msra.mxu0 %v476
    %1287 = vmatprep.subr.mxu0 %v481
    %1288 = vmatpush1.msra.mxu0 %v480
    %1289 = vmatprep.subr.mxu0 %v485
    %1290 = vmatpush1.msra.mxu0 %v484
    %1291 = vmatprep.subr.mxu0 %v489
    %1292 = vmatpush1.msra.mxu0 %v488
    %1293 = vmatprep.subr.mxu0 %v493
    %1294 = vmatpush1.msra.mxu0 %v492
    %1295 = vmatprep.subr.mxu0 %v497
    %1296 = vmatpush1.msra.mxu0 %v496
    %1297 = vmatprep.subr.mxu0 0.0
    %1298 = vmatpush1.msra.mxu0 0.0
    %1299 = vmatprep.subr.mxu0 0.0
    %1300 = vmatpush1.msra.mxu0 0.0
    %1301 = vmatprep.subr.mxu0 0.0
    %1302 = vmatpush1.msra.mxu0 0.0
    %1303 = vmatprep.subr.mxu0 0.0
    %1304 = vmatpush1.msra.mxu0 0.0
    %1305 = vmatprep.subr.mxu0 0.0
    %1306 = vmatpush1.msra.mxu0 0.0
    %1307 = vmatprep.subr.mxu0 0.0
    %1308 = vmatpush1.msra.mxu0 0.0
    %1309 = vmatprep.subr.mxu0 0.0
    %1310 = vmatpush1.msra.mxu0 0.0
    %1311 = vmatprep.subr.mxu0 0.0
    %1312 = vmatpush1.msra.mxu0 0.0
    %1313 = vmatprep.subr.mxu0 0.0
    %1314 = vmatpush1.msra.mxu0 0.0
    %1315 = vmatprep.subr.mxu0 0.0
    %1316 = vmatpush1.msra.mxu0 0.0
    %1317 = vmatprep.subr.mxu0 0.0
    %1318 = vmatpush1.msra.mxu0 0.0
    %1319 = vmatprep.subr.mxu0 0.0
    %1320 = vmatpush1.msra.mxu0 0.0
    %1321 = vmatprep.subr.mxu0 0.0
    %1322 = vmatpush1.msra.mxu0 0.0
    %1323 = vmatprep.subr.mxu0 0.0
    %1324 = vmatpush1.msra.mxu0 0.0
    %1325 = vmatprep.subr.mxu0 0.0
    %1326 = vmatpush1.msra.mxu0 0.0
    %1327 = vmatprep.subr.mxu0 0.0
    %1328 = vmatpush1.msra.mxu0 0.0
    %1329 = vmatprep.mubr.f32.mxu0 0.0
    %1330 = vmatmul.mubr.f32.gmra.mrb[0].mxu0 %v1189
    %v1331 = vpop.f32.mrb[0].mxu0
    %v1332 = vadd.f32 0.0, %v1331
    %v1333 = vpop.f32.mrb[0].mxu0
    %v1334 = vadd.f32 0.0, %v1333
    %1335 = vdwg.mxu0
    %v1336 = vadd.f32 %v1190, %v1261
    %v1337 = vadd.f32 %v1191, %v1263
    %v1338 = vadd.f32 %v1192, %v1332
    %v1339 = vadd.f32 %v1193, %v1334
    %v1340 = vxor.u32 %v1336, 2147483648
    %v1341 = vxor.u32 %v1337, 2147483648
    %v1342 = vxor.u32 %v1338, 2147483648
    %v1343 = vmul.f32 %v1340, 1.442695
    %v1344 = vpow.pop %v1343
    %v1345 = vmul.f32 %v1341, 1.442695
    %v1346 = vpow.pop %v1345
    %v1347 = vmul.f32 %v1342, 1.442695
    %v1348 = vpow.pop %v1347
    %v1349 = vadd.f32 %v1344, 1.0
    %v1350 = vadd.f32 %v1346, 1.0
    %v1351 = vadd.f32 %v1348, 1.0
    %v1352 = vrcp.pop %v1349
    %v1353 = vmul.f32 1.0, %v1352
    %v1354 = vrcp.pop %v1350
    %v1355 = vmul.f32 1.0, %v1354
    %v1356 = vrcp.pop %v1351
    %v1357 = vmul.f32 1.0, %v1356
    %v1358 = vtanh.pop %v1339
    %v1359 = vmul.f32 %v1355, %v1187
    %v1360 = vmul.f32 %v1353, %v1358
    %v1361 = vadd.f32 %v1359, %v1360
    %v1362 = vtanh.pop %v1361
    %v1363 = vmul.f32 %v1357, %v1362
    %v1364 = vld [vmem:[#allocation2 + $0xa0] sm:$0xff]
    %v1365 = vld [vmem:[#allocation2 + $0xa8] sm:$0xff]
    %v1366 = vld [vmem:[#allocation2 + $0xb0] sm:$0xff]
    %v1367 = vld [vmem:[#allocation2 + $0xb8] sm:$0xff]
    %1368 = vmatprep.subr.mxu0 %v435
    %1369 = vmatpush1.msra.mxu0 %v434
    %1370 = vmatprep.subr.mxu0 %v439
    %1371 = vmatpush1.msra.mxu0 %v438
    %1372 = vmatprep.subr.mxu0 %v443
    %1373 = vmatpush1.msra.mxu0 %v442
    %1374 = vmatprep.subr.mxu0 %v447
    %1375 = vmatpush1.msra.mxu0 %v446
    %1376 = vmatprep.subr.mxu0 %v451
    %1377 = vmatpush1.msra.mxu0 %v450
    %1378 = vmatprep.subr.mxu0 %v455
    %1379 = vmatpush1.msra.mxu0 %v454
    %1380 = vmatprep.subr.mxu0 %v459
    %1381 = vmatpush1.msra.mxu0 %v458
    %1382 = vmatprep.subr.mxu0 %v463
    %1383 = vmatpush1.msra.mxu0 %v462
    %1384 = vmatprep.subr.mxu0 %v467
    %1385 = vmatpush1.msra.mxu0 %v466
    %1386 = vmatprep.subr.mxu0 %v471
    %1387 = vmatpush1.msra.mxu0 %v470
    %1388 = vmatprep.subr.mxu0 %v475
    %1389 = vmatpush1.msra.mxu0 %v474
    %1390 = vmatprep.subr.mxu0 %v479
    %1391 = vmatpush1.msra.mxu0 %v478
    %1392 = vmatprep.subr.mxu0 %v483
    %1393 = vmatpush1.msra.mxu0 %v482
    %1394 = vmatprep.subr.mxu0 %v487
    %1395 = vmatpush1.msra.mxu0 %v486
    %1396 = vmatprep.subr.mxu0 %v491
    %1397 = vmatpush1.msra.mxu0 %v490
    %1398 = vmatprep.subr.mxu0 %v495
    %1399 = vmatpush1.msra.mxu0 %v494
    %1400 = vmatprep.subr.mxu0 0.0
    %1401 = vmatpush1.msra.mxu0 0.0
    %1402 = vmatprep.subr.mxu0 0.0
    %1403 = vmatpush1.msra.mxu0 0.0
    %1404 = vmatprep.subr.mxu0 0.0
    %1405 = vmatpush1.msra.mxu0 0.0
    %1406 = vmatprep.subr.mxu0 0.0
    %1407 = vmatpush1.msra.mxu0 0.0
    %1408 = vmatprep.subr.mxu0 0.0
    %1409 = vmatpush1.msra.mxu0 0.0
    %1410 = vmatprep.subr.mxu0 0.0
    %1411 = vmatpush1.msra.mxu0 0.0
    %1412 = vmatprep.subr.mxu0 0.0
    %1413 = vmatpush1.msra.mxu0 0.0
    %1414 = vmatprep.subr.mxu0 0.0
    %1415 = vmatpush1.msra.mxu0 0.0
    %1416 = vmatprep.subr.mxu0 0.0
    %1417 = vmatpush1.msra.mxu0 0.0
    %1418 = vmatprep.subr.mxu0 0.0
    %1419 = vmatpush1.msra.mxu0 0.0
    %1420 = vmatprep.subr.mxu0 0.0
    %1421 = vmatpush1.msra.mxu0 0.0
    %1422 = vmatprep.subr.mxu0 0.0
    %1423 = vmatpush1.msra.mxu0 0.0
    %1424 = vmatprep.subr.mxu0 0.0
    %1425 = vmatpush1.msra.mxu0 0.0
    %1426 = vmatprep.subr.mxu0 0.0
    %1427 = vmatpush1.msra.mxu0 0.0
    %1428 = vmatprep.subr.mxu0 0.0
    %1429 = vmatpush1.msra.mxu0 0.0
    %1430 = vmatprep.subr.mxu0 0.0
    %1431 = vmatpush1.msra.mxu0 0.0
    %1432 = vmatprep.mubr.f32.mxu0 0.0
    %1433 = vmatmul.mubr.f32.gmra.mrb[0].mxu0 %v1363
    %v1434 = vpop.f32.mrb[0].mxu0
    %v1435 = vadd.f32 0.0, %v1434
    %v1436 = vpop.f32.mrb[0].mxu0
    %v1437 = vadd.f32 0.0, %v1436
    %1438 = vdwg.mxu0
    %1439 = vmatprep.subr.mxu0 %v437
    %1440 = vmatpush1.msra.mxu0 %v436
    %1441 = vmatprep.subr.mxu0 %v441
    %1442 = vmatpush1.msra.mxu0 %v440
    %1443 = vmatprep.subr.mxu0 %v445
    %1444 = vmatpush1.msra.mxu0 %v444
    %1445 = vmatprep.subr.mxu0 %v449
    %1446 = vmatpush1.msra.mxu0 %v448
    %1447 = vmatprep.subr.mxu0 %v453
    %1448 = vmatpush1.msra.mxu0 %v452
    %1449 = vmatprep.subr.mxu0 %v457
    %1450 = vmatpush1.msra.mxu0 %v456
    %1451 = vmatprep.subr.mxu0 %v461
    %1452 = vmatpush1.msra.mxu0 %v460
    %1453 = vmatprep.subr.mxu0 %v465
    %1454 = vmatpush1.msra.mxu0 %v464
    %1455 = vmatprep.subr.mxu0 %v469
    %1456 = vmatpush1.msra.mxu0 %v468
    %1457 = vmatprep.subr.mxu0 %v473
    %1458 = vmatpush1.msra.mxu0 %v472
    %1459 = vmatprep.subr.mxu0 %v477
    %1460 = vmatpush1.msra.mxu0 %v476
    %1461 = vmatprep.subr.mxu0 %v481
    %1462 = vmatpush1.msra.mxu0 %v480
    %1463 = vmatprep.subr.mxu0 %v485
    %1464 = vmatpush1.msra.mxu0 %v484
    %1465 = vmatprep.subr.mxu0 %v489
    %1466 = vmatpush1.msra.mxu0 %v488
    %1467 = vmatprep.subr.mxu0 %v493
    %1468 = vmatpush1.msra.mxu0 %v492
    %1469 = vmatprep.subr.mxu0 %v497
    %1470 = vmatpush1.msra.mxu0 %v496
    %1471 = vmatprep.subr.mxu0 0.0
    %1472 = vmatpush1.msra.mxu0 0.0
    %1473 = vmatprep.subr.mxu0 0.0
    %1474 = vmatpush1.msra.mxu0 0.0
    %1475 = vmatprep.subr.mxu0 0.0
    %1476 = vmatpush1.msra.mxu0 0.0
    %1477 = vmatprep.subr.mxu0 0.0
    %1478 = vmatpush1.msra.mxu0 0.0
    %1479 = vmatprep.subr.mxu0 0.0
    %1480 = vmatpush1.msra.mxu0 0.0
    %1481 = vmatprep.subr.mxu0 0.0
    %1482 = vmatpush1.msra.mxu0 0.0
    %1483 = vmatprep.subr.mxu0 0.0
    %1484 = vmatpush1.msra.mxu0 0.0
    %1485 = vmatprep.subr.mxu0 0.0
    %1486 = vmatpush1.msra.mxu0 0.0
    %1487 = vmatprep.subr.mxu0 0.0
    %1488 = vmatpush1.msra.mxu0 0.0
    %1489 = vmatprep.subr.mxu0 0.0
    %1490 = vmatpush1.msra.mxu0 0.0
    %1491 = vmatprep.subr.mxu0 0.0
    %1492 = vmatpush1.msra.mxu0 0.0
    %1493 = vmatprep.subr.mxu0 0.0
    %1494 = vmatpush1.msra.mxu0 0.0
    %1495 = vmatprep.subr.mxu0 0.0
    %1496 = vmatpush1.msra.mxu0 0.0
    %1497 = vmatprep.subr.mxu0 0.0
    %1498 = vmatpush1.msra.mxu0 0.0
    %1499 = vmatprep.subr.mxu0 0.0
    %1500 = vmatpush1.msra.mxu0 0.0
    %1501 = vmatprep.subr.mxu0 0.0
    %1502 = vmatpush1.msra.mxu0 0.0
    %1503 = vmatprep.mubr.f32.mxu0 0.0
    %1504 = vmatmul.mubr.f32.gmra.mrb[0].mxu0 %v1363
    %v1505 = vpop.f32.mrb[0].mxu0
    %v1506 = vadd.f32 0.0, %v1505
    %v1507 = vpop.f32.mrb[0].mxu0
    %v1508 = vadd.f32 0.0, %v1507
    %1509 = vdwg.mxu0
    %v1510 = vadd.f32 %v1364, %v1435
    %v1511 = vadd.f32 %v1365, %v1437
    %v1512 = vadd.f32 %v1366, %v1506
    %v1513 = vadd.f32 %v1367, %v1508
    %v1514 = vxor.u32 %v1510, 2147483648
    %v1515 = vxor.u32 %v1511, 2147483648
    %v1516 = vxor.u32 %v1512, 2147483648
    %v1517 = vmul.f32 %v1514, 1.442695
    %v1518 = vpow.pop %v1517
    %v1519 = vmul.f32 %v1515, 1.442695
    %v1520 = vpow.pop %v1519
    %v1521 = vmul.f32 %v1516, 1.442695
    %v1522 = vpow.pop %v1521
    %v1523 = vadd.f32 %v1518, 1.0
    %v1524 = vadd.f32 %v1520, 1.0
    %v1525 = vadd.f32 %v1522, 1.0
    %v1526 = vrcp.pop %v1523
    %v1527 = vmul.f32 1.0, %v1526
    %v1528 = vrcp.pop %v1524
    %v1529 = vmul.f32 1.0, %v1528
    %v1530 = vrcp.pop %v1525
    %v1531 = vmul.f32 1.0, %v1530
    %v1532 = vtanh.pop %v1513
    %v1533 = vmul.f32 %v1529, %v1361
    %v1534 = vmul.f32 %v1527, %v1532
    %v1535 = vadd.f32 %v1533, %v1534
    %v1536 = vtanh.pop %v1535
    %v1537 = vmul.f32 %v1531, %v1536
    %v1538 = vld [vmem:[#allocation2 + $0xc0] sm:$0xff]
    %v1539 = vld [vmem:[#allocation2 + $0xc8] sm:$0xff]
    %v1540 = vld [vmem:[#allocation2 + $0xd0] sm:$0xff]
    %v1541 = vld [vmem:[#allocation2 + $0xd8] sm:$0xff]
    %1542 = vmatprep.subr.mxu0 %v435
    %1543 = vmatpush1.msra.mxu0 %v434
    %1544 = vmatprep.subr.mxu0 %v439
    %1545 = vmatpush1.msra.mxu0 %v438
    %1546 = vmatprep.subr.mxu0 %v443
    %1547 = vmatpush1.msra.mxu0 %v442
    %1548 = vmatprep.subr.mxu0 %v447
    %1549 = vmatpush1.msra.mxu0 %v446
    %1550 = vmatprep.subr.mxu0 %v451
    %1551 = vmatpush1.msra.mxu0 %v450
    %1552 = vmatprep.subr.mxu0 %v455
    %1553 = vmatpush1.msra.mxu0 %v454
    %1554 = vmatprep.subr.mxu0 %v459
    %1555 = vmatpush1.msra.mxu0 %v458
    %1556 = vmatprep.subr.mxu0 %v463
    %1557 = vmatpush1.msra.mxu0 %v462
    %1558 = vmatprep.subr.mxu0 %v467
    %1559 = vmatpush1.msra.mxu0 %v466
    %1560 = vmatprep.subr.mxu0 %v471
    %1561 = vmatpush1.msra.mxu0 %v470
    %1562 = vmatprep.subr.mxu0 %v475
    %1563 = vmatpush1.msra.mxu0 %v474
    %1564 = vmatprep.subr.mxu0 %v479
    %1565 = vmatpush1.msra.mxu0 %v478
    %1566 = vmatprep.subr.mxu0 %v483
    %1567 = vmatpush1.msra.mxu0 %v482
    %1568 = vmatprep.subr.mxu0 %v487
    %1569 = vmatpush1.msra.mxu0 %v486
    %1570 = vmatprep.subr.mxu0 %v491
    %1571 = vmatpush1.msra.mxu0 %v490
    %1572 = vmatprep.subr.mxu0 %v495
    %1573 = vmatpush1.msra.mxu0 %v494
    %1574 = vmatprep.subr.mxu0 0.0
    %1575 = vmatpush1.msra.mxu0 0.0
    %1576 = vmatprep.subr.mxu0 0.0
    %1577 = vmatpush1.msra.mxu0 0.0
    %1578 = vmatprep.subr.mxu0 0.0
    %1579 = vmatpush1.msra.mxu0 0.0
    %1580 = vmatprep.subr.mxu0 0.0
    %1581 = vmatpush1.msra.mxu0 0.0
    %1582 = vmatprep.subr.mxu0 0.0
    %1583 = vmatpush1.msra.mxu0 0.0
    %1584 = vmatprep.subr.mxu0 0.0
    %1585 = vmatpush1.msra.mxu0 0.0
    %1586 = vmatprep.subr.mxu0 0.0
    %1587 = vmatpush1.msra.mxu0 0.0
    %1588 = vmatprep.subr.mxu0 0.0
    %1589 = vmatpush1.msra.mxu0 0.0
    %1590 = vmatprep.subr.mxu0 0.0
    %1591 = vmatpush1.msra.mxu0 0.0
    %1592 = vmatprep.subr.mxu0 0.0
    %1593 = vmatpush1.msra.mxu0 0.0
    %1594 = vmatprep.subr.mxu0 0.0
    %1595 = vmatpush1.msra.mxu0 0.0
    %1596 = vmatprep.subr.mxu0 0.0
    %1597 = vmatpush1.msra.mxu0 0.0
    %1598 = vmatprep.subr.mxu0 0.0
    %1599 = vmatpush1.msra.mxu0 0.0
    %1600 = vmatprep.subr.mxu0 0.0
    %1601 = vmatpush1.msra.mxu0 0.0
    %1602 = vmatprep.subr.mxu0 0.0
    %1603 = vmatpush1.msra.mxu0 0.0
    %1604 = vmatprep.subr.mxu0 0.0
    %1605 = vmatpush1.msra.mxu0 0.0
    %1606 = vmatprep.mubr.f32.mxu0 0.0
    %1607 = vmatmul.mubr.f32.gmra.mrb[0].mxu0 %v1537
    %v1608 = vpop.f32.mrb[0].mxu0
    %v1609 = vadd.f32 0.0, %v1608
    %v1610 = vpop.f32.mrb[0].mxu0
    %v1611 = vadd.f32 0.0, %v1610
    %1612 = vdwg.mxu0
    %1613 = vmatprep.subr.mxu0 %v437
    %1614 = vmatpush1.msra.mxu0 %v436
    %1615 = vmatprep.subr.mxu0 %v441
    %1616 = vmatpush1.msra.mxu0 %v440
    %1617 = vmatprep.subr.mxu0 %v445
    %1618 = vmatpush1.msra.mxu0 %v444
    %1619 = vmatprep.subr.mxu0 %v449
    %1620 = vmatpush1.msra.mxu0 %v448
    %1621 = vmatprep.subr.mxu0 %v453
    %1622 = vmatpush1.msra.mxu0 %v452
    %1623 = vmatprep.subr.mxu0 %v457
    %1624 = vmatpush1.msra.mxu0 %v456
    %1625 = vmatprep.subr.mxu0 %v461
    %1626 = vmatpush1.msra.mxu0 %v460
    %1627 = vmatprep.subr.mxu0 %v465
    %1628 = vmatpush1.msra.mxu0 %v464
    %1629 = vmatprep.subr.mxu0 %v469
    %1630 = vmatpush1.msra.mxu0 %v468
    %1631 = vmatprep.subr.mxu0 %v473
    %1632 = vmatpush1.msra.mxu0 %v472
    %1633 = vmatprep.subr.mxu0 %v477
    %1634 = vmatpush1.msra.mxu0 %v476
    %1635 = vmatprep.subr.mxu0 %v481
    %1636 = vmatpush1.msra.mxu0 %v480
    %1637 = vmatprep.subr.mxu0 %v485
    %1638 = vmatpush1.msra.mxu0 %v484
    %1639 = vmatprep.subr.mxu0 %v489
    %1640 = vmatpush1.msra.mxu0 %v488
    %1641 = vmatprep.subr.mxu0 %v493
    %1642 = vmatpush1.msra.mxu0 %v492
    %1643 = vmatprep.subr.mxu0 %v497
    %1644 = vmatpush1.msra.mxu0 %v496
    %1645 = vmatprep.subr.mxu0 0.0
    %1646 = vmatpush1.msra.mxu0 0.0
    %1647 = vmatprep.subr.mxu0 0.0
    %1648 = vmatpush1.msra.mxu0 0.0
    %1649 = vmatprep.subr.mxu0 0.0
    %1650 = vmatpush1.msra.mxu0 0.0
    %1651 = vmatprep.subr.mxu0 0.0
    %1652 = vmatpush1.msra.mxu0 0.0
    %1653 = vmatprep.subr.mxu0 0.0
    %1654 = vmatpush1.msra.mxu0 0.0
    %1655 = vmatprep.subr.mxu0 0.0
    %1656 = vmatpush1.msra.mxu0 0.0
    %1657 = vmatprep.subr.mxu0 0.0
    %1658 = vmatpush1.msra.mxu0 0.0
    %1659 = vmatprep.subr.mxu0 0.0
    %1660 = vmatpush1.msra.mxu0 0.0
    %1661 = vmatprep.subr.mxu0 0.0
    %1662 = vmatpush1.msra.mxu0 0.0
    %1663 = vmatprep.subr.mxu0 0.0
    %1664 = vmatpush1.msra.mxu0 0.0
    %1665 = vmatprep.subr.mxu0 0.0
    %1666 = vmatpush1.msra.mxu0 0.0
    %1667 = vmatprep.subr.mxu0 0.0
    %1668 = vmatpush1.msra.mxu0 0.0
    %1669 = vmatprep.subr.mxu0 0.0
    %1670 = vmatpush1.msra.mxu0 0.0
    %1671 = vmatprep.subr.mxu0 0.0
    %1672 = vmatpush1.msra.mxu0 0.0
    %1673 = vmatprep.subr.mxu0 0.0
    %1674 = vmatpush1.msra.mxu0 0.0
    %1675 = vmatprep.subr.mxu0 0.0
    %1676 = vmatpush1.msra.mxu0 0.0
    %1677 = vmatprep.mubr.f32.mxu0 0.0
    %1678 = vmatmul.mubr.f32.gmra.mrb[0].mxu0 %v1537
    %v1679 = vpop.f32.mrb[0].mxu0
    %v1680 = vadd.f32 0.0, %v1679
    %v1681 = vpop.f32.mrb[0].mxu0
    %v1682 = vadd.f32 0.0, %v1681
    %1683 = vdwg.mxu0
    %v1684 = vadd.f32 %v1538, %v1609
    %v1685 = vadd.f32 %v1539, %v1611
    %v1686 = vadd.f32 %v1540, %v1680
    %v1687 = vadd.f32 %v1541, %v1682
    %v1688 = vxor.u32 %v1684, 2147483648
    %v1689 = vxor.u32 %v1685, 2147483648
    %v1690 = vxor.u32 %v1686, 2147483648
    %v1691 = vmul.f32 %v1688, 1.442695
    %v1692 = vpow.pop %v1691
    %v1693 = vmul.f32 %v1689, 1.442695
    %v1694 = vpow.pop %v1693
    %v1695 = vmul.f32 %v1690, 1.442695
    %v1696 = vpow.pop %v1695
    %v1697 = vadd.f32 %v1692, 1.0
    %v1698 = vadd.f32 %v1694, 1.0
    %v1699 = vadd.f32 %v1696, 1.0
    %v1700 = vrcp.pop %v1697
    %v1701 = vmul.f32 1.0, %v1700
    %v1702 = vrcp.pop %v1698
    %v1703 = vmul.f32 1.0, %v1702
    %v1704 = vrcp.pop %v1699
    %v1705 = vmul.f32 1.0, %v1704
    %v1706 = vtanh.pop %v1687
    %v1707 = vmul.f32 %v1703, %v1535
    %v1708 = vmul.f32 %v1701, %v1706
    %v1709 = vadd.f32 %v1707, %v1708
    %v1710 = vtanh.pop %v1709
    %v1711 = vmul.f32 %v1705, %v1710
    %v1712 = vld [vmem:[#allocation2 + $0xe0] sm:$0xff]
    %v1713 = vld [vmem:[#allocation2 + $0xe8] sm:$0xff]
    %v1714 = vld [vmem:[#allocation2 + $0xf0] sm:$0xff]
    %v1715 = vld [vmem:[#allocation2 + $0xf8] sm:$0xff]
    %1716 = vmatprep.subr.mxu0 %v435
    %1717 = vmatpush1.msra.mxu0 %v434
    %1718 = vmatprep.subr.mxu0 %v439
    %1719 = vmatpush1.msra.mxu0 %v438
    %1720 = vmatprep.subr.mxu0 %v443
    %1721 = vmatpush1.msra.mxu0 %v442
    %1722 = vmatprep.subr.mxu0 %v447
    %1723 = vmatpush1.msra.mxu0 %v446
    %1724 = vmatprep.subr.mxu0 %v451
    %1725 = vmatpush1.msra.mxu0 %v450
    %1726 = vmatprep.subr.mxu0 %v455
    %1727 = vmatpush1.msra.mxu0 %v454
    %1728 = vmatprep.subr.mxu0 %v459
    %1729 = vmatpush1.msra.mxu0 %v458
    %1730 = vmatprep.subr.mxu0 %v463
    %1731 = vmatpush1.msra.mxu0 %v462
    %1732 = vmatprep.subr.mxu0 %v467
    %1733 = vmatpush1.msra.mxu0 %v466
    %1734 = vmatprep.subr.mxu0 %v471
    %1735 = vmatpush1.msra.mxu0 %v470
    %1736 = vmatprep.subr.mxu0 %v475
    %1737 = vmatpush1.msra.mxu0 %v474
    %1738 = vmatprep.subr.mxu0 %v479
    %1739 = vmatpush1.msra.mxu0 %v478
    %1740 = vmatprep.subr.mxu0 %v483
    %1741 = vmatpush1.msra.mxu0 %v482
    %1742 = vmatprep.subr.mxu0 %v487
    %1743 = vmatpush1.msra.mxu0 %v486
    %1744 = vmatprep.subr.mxu0 %v491
    %1745 = vmatpush1.msra.mxu0 %v490
    %1746 = vmatprep.subr.mxu0 %v495
    %1747 = vmatpush1.msra.mxu0 %v494
    %1748 = vmatprep.subr.mxu0 0.0
    %1749 = vmatpush1.msra.mxu0 0.0
    %1750 = vmatprep.subr.mxu0 0.0
    %1751 = vmatpush1.msra.mxu0 0.0
    %1752 = vmatprep.subr.mxu0 0.0
    %1753 = vmatpush1.msra.mxu0 0.0
    %1754 = vmatprep.subr.mxu0 0.0
    %1755 = vmatpush1.msra.mxu0 0.0
    %1756 = vmatprep.subr.mxu0 0.0
    %1757 = vmatpush1.msra.mxu0 0.0
    %1758 = vmatprep.subr.mxu0 0.0
    %1759 = vmatpush1.msra.mxu0 0.0
    %1760 = vmatprep.subr.mxu0 0.0
    %1761 = vmatpush1.msra.mxu0 0.0
    %1762 = vmatprep.subr.mxu0 0.0
    %1763 = vmatpush1.msra.mxu0 0.0
    %1764 = vmatprep.subr.mxu0 0.0
    %1765 = vmatpush1.msra.mxu0 0.0
    %1766 = vmatprep.subr.mxu0 0.0
    %1767 = vmatpush1.msra.mxu0 0.0
    %1768 = vmatprep.subr.mxu0 0.0
    %1769 = vmatpush1.msra.mxu0 0.0
    %1770 = vmatprep.subr.mxu0 0.0
    %1771 = vmatpush1.msra.mxu0 0.0
    %1772 = vmatprep.subr.mxu0 0.0
    %1773 = vmatpush1.msra.mxu0 0.0
    %1774 = vmatprep.subr.mxu0 0.0
    %1775 = vmatpush1.msra.mxu0 0.0
    %1776 = vmatprep.subr.mxu0 0.0
    %1777 = vmatpush1.msra.mxu0 0.0
    %1778 = vmatprep.subr.mxu0 0.0
    %1779 = vmatpush1.msra.mxu0 0.0
    %1780 = vmatprep.mubr.f32.mxu0 0.0
    %1781 = vmatmul.mubr.f32.gmra.mrb[0].mxu0 %v1711
    %v1782 = vpop.f32.mrb[0].mxu0
    %v1783 = vadd.f32 0.0, %v1782
    %v1784 = vpop.f32.mrb[0].mxu0
    %v1785 = vadd.f32 0.0, %v1784
    %1786 = vdwg.mxu0
    %1787 = vmatprep.subr.mxu0 %v437
    %1788 = vmatpush1.msra.mxu0 %v436
    %1789 = vmatprep.subr.mxu0 %v441
    %1790 = vmatpush1.msra.mxu0 %v440
    %1791 = vmatprep.subr.mxu0 %v445
    %1792 = vmatpush1.msra.mxu0 %v444
    %1793 = vmatprep.subr.mxu0 %v449
    %1794 = vmatpush1.msra.mxu0 %v448
    %1795 = vmatprep.subr.mxu0 %v453
    %1796 = vmatpush1.msra.mxu0 %v452
    %1797 = vmatprep.subr.mxu0 %v457
    %1798 = vmatpush1.msra.mxu0 %v456
    %1799 = vmatprep.subr.mxu0 %v461
    %1800 = vmatpush1.msra.mxu0 %v460
    %1801 = vmatprep.subr.mxu0 %v465
    %1802 = vmatpush1.msra.mxu0 %v464
    %1803 = vmatprep.subr.mxu0 %v469
    %1804 = vmatpush1.msra.mxu0 %v468
    %1805 = vmatprep.subr.mxu0 %v473
    %1806 = vmatpush1.msra.mxu0 %v472
    %1807 = vmatprep.subr.mxu0 %v477
    %1808 = vmatpush1.msra.mxu0 %v476
    %1809 = vmatprep.subr.mxu0 %v481
    %1810 = vmatpush1.msra.mxu0 %v480
    %1811 = vmatprep.subr.mxu0 %v485
    %1812 = vmatpush1.msra.mxu0 %v484
    %1813 = vmatprep.subr.mxu0 %v489
    %1814 = vmatpush1.msra.mxu0 %v488
    %1815 = vmatprep.subr.mxu0 %v493
    %1816 = vmatpush1.msra.mxu0 %v492
    %1817 = vmatprep.subr.mxu0 %v497
    %1818 = vmatpush1.msra.mxu0 %v496
    %1819 = vmatprep.subr.mxu0 0.0
    %1820 = vmatpush1.msra.mxu0 0.0
    %1821 = vmatprep.subr.mxu0 0.0
    %1822 = vmatpush1.msra.mxu0 0.0
    %1823 = vmatprep.subr.mxu0 0.0
    %1824 = vmatpush1.msra.mxu0 0.0
    %1825 = vmatprep.subr.mxu0 0.0
    %1826 = vmatpush1.msra.mxu0 0.0
    %1827 = vmatprep.subr.mxu0 0.0
    %1828 = vmatpush1.msra.mxu0 0.0
    %1829 = vmatprep.subr.mxu0 0.0
    %1830 = vmatpush1.msra.mxu0 0.0
    %1831 = vmatprep.subr.mxu0 0.0
    %1832 = vmatpush1.msra.mxu0 0.0
    %1833 = vmatprep.subr.mxu0 0.0
    %1834 = vmatpush1.msra.mxu0 0.0
    %1835 = vmatprep.subr.mxu0 0.0
    %1836 = vmatpush1.msra.mxu0 0.0
    %1837 = vmatprep.subr.mxu0 0.0
    %1838 = vmatpush1.msra.mxu0 0.0
    %1839 = vmatprep.subr.mxu0 0.0
    %1840 = vmatpush1.msra.mxu0 0.0
    %1841 = vmatprep.subr.mxu0 0.0
    %1842 = vmatpush1.msra.mxu0 0.0
    %1843 = vmatprep.subr.mxu0 0.0
    %1844 = vmatpush1.msra.mxu0 0.0
    %1845 = vmatprep.subr.mxu0 0.0
    %1846 = vmatpush1.msra.mxu0 0.0
    %1847 = vmatprep.subr.mxu0 0.0
    %1848 = vmatpush1.msra.mxu0 0.0
    %1849 = vmatprep.subr.mxu0 0.0
    %1850 = vmatpush1.msra.mxu0 0.0
    %1851 = vmatprep.mubr.f32.mxu0 0.0
    %1852 = vmatmul.mubr.f32.gmra.mrb[0].mxu0 %v1711
    %v1853 = vpop.f32.mrb[0].mxu0
    %v1854 = vadd.f32 0.0, %v1853
    %v1855 = vpop.f32.mrb[0].mxu0
    %v1856 = vadd.f32 0.0, %v1855
    %1857 = vdwg.mxu0
    %v1858 = vadd.f32 %v1712, %v1783
    %v1859 = vadd.f32 %v1713, %v1785
    %v1860 = vadd.f32 %v1714, %v1854
    %v1861 = vadd.f32 %v1715, %v1856
    %v1862 = vxor.u32 %v1858, 2147483648
    %v1863 = vxor.u32 %v1859, 2147483648
    %v1864 = vxor.u32 %v1860, 2147483648
    %v1865 = vmul.f32 %v1862, 1.442695
    %v1866 = vpow.pop %v1865
    %v1867 = vmul.f32 %v1863, 1.442695
    %v1868 = vpow.pop %v1867
    %v1869 = vmul.f32 %v1864, 1.442695
    %v1870 = vpow.pop %v1869
    %v1871 = vadd.f32 %v1866, 1.0
    %v1872 = vadd.f32 %v1868, 1.0
    %v1873 = vadd.f32 %v1870, 1.0
    %v1874 = vrcp.pop %v1871
    %v1875 = vmul.f32 1.0, %v1874
    %v1876 = vrcp.pop %v1872
    %v1877 = vmul.f32 1.0, %v1876
    %v1878 = vrcp.pop %v1873
    %v1879 = vmul.f32 1.0, %v1878
    %v1880 = vtanh.pop %v1861
    %v1881 = vmul.f32 %v1877, %v1709
    %v1882 = vmul.f32 %v1875, %v1880
    %v1883 = vadd.f32 %v1881, %v1882
    %v1884 = vtanh.pop %v1883
    %v1885 = vmul.f32 %v1879, %v1884
    %v1886 = vld [vmem:[%s1] sm:$0xff]
    %v1887 = vld [vmem:[%s5] sm:$0x3f]
    %v1888 = vld [vmem:[%s5 + $0x8] sm:$0x3f]
    %v1889 = vld [vmem:[#allocation7] sm:$0xff]
    %v1890 = vld [vmem:[#allocation7 + $0x8] sm:$0xff]
    %v1891 = vld [vmem:[#allocation7 + $0x10] sm:$0xff]
    %v1892 = vld [vmem:[#allocation7 + $0x18] sm:$0xff]
    %v1893 = vld [vmem:[#allocation7 + $0x20] sm:$0xff]
    %v1894 = vld [vmem:[#allocation7 + $0x28] sm:$0xff]
    %v1895 = vld [vmem:[#allocation7 + $0x30] sm:$0xff]
    %v1896 = vld [vmem:[#allocation7 + $0x38] sm:$0xff]
    %v1897 = vld [vmem:[#allocation7 + $0x40] sm:$0xff]
    %v1898 = vld [vmem:[#allocation7 + $0x48] sm:$0xff]
    %v1899 = vld [vmem:[#allocation7 + $0x50] sm:$0xff]
    %v1900 = vld [vmem:[#allocation7 + $0x58] sm:$0xff]
    %v1901 = vld [vmem:[#allocation7 + $0x60] sm:$0xff]
    %v1902 = vld [vmem:[#allocation7 + $0x68] sm:$0xff]
    %v1903 = vld [vmem:[#allocation7 + $0x70] sm:$0xff]
    %v1904 = vld [vmem:[#allocation7 + $0x78] sm:$0xff]
    %v1905 = vld [vmem:[#allocation7 + $0x80] sm:$0xff]
    %v1906 = vld [vmem:[#allocation7 + $0x88] sm:$0xff]
    %v1907 = vld [vmem:[#allocation7 + $0x90] sm:$0xff]
    %v1908 = vld [vmem:[#allocation7 + $0x98] sm:$0xff]
    %v1909 = vld [vmem:[#allocation7 + $0xa0] sm:$0xff]
    %v1910 = vld [vmem:[#allocation7 + $0xa8] sm:$0xff]
    %v1911 = vld [vmem:[#allocation7 + $0xb0] sm:$0xff]
    %v1912 = vld [vmem:[#allocation7 + $0xb8] sm:$0xff]
    %v1913 = vld [vmem:[#allocation7 + $0xc0] sm:$0xff]
    %v1914 = vld [vmem:[#allocation7 + $0xc8] sm:$0xff]
    %v1915 = vld [vmem:[#allocation7 + $0xd0] sm:$0xff]
    %v1916 = vld [vmem:[#allocation7 + $0xd8] sm:$0xff]
    %v1917 = vld [vmem:[#allocation7 + $0xe0] sm:$0xff]
    %v1918 = vld [vmem:[#allocation7 + $0xe8] sm:$0xff]
    %v1919 = vld [vmem:[#allocation7 + $0xf0] sm:$0xff]
    %v1920 = vld [vmem:[#allocation7 + $0xf8] sm:$0xff]
    %1921 = vmatprep.subr.mxu0 %v1890
    %1922 = vmatpush1.msra.mxu0 %v1889
    %1923 = vmatprep.subr.mxu0 %v1892
    %1924 = vmatpush1.msra.mxu0 %v1891
    %1925 = vmatprep.subr.mxu0 %v1894
    %1926 = vmatpush1.msra.mxu0 %v1893
    %1927 = vmatprep.subr.mxu0 %v1896
    %1928 = vmatpush1.msra.mxu0 %v1895
    %1929 = vmatprep.subr.mxu0 %v1898
    %1930 = vmatpush1.msra.mxu0 %v1897
    %1931 = vmatprep.subr.mxu0 %v1900
    %1932 = vmatpush1.msra.mxu0 %v1899
    %1933 = vmatprep.subr.mxu0 %v1902
    %1934 = vmatpush1.msra.mxu0 %v1901
    %1935 = vmatprep.subr.mxu0 %v1904
    %1936 = vmatpush1.msra.mxu0 %v1903
    %1937 = vmatprep.subr.mxu0 %v1906
    %1938 = vmatpush1.msra.mxu0 %v1905
    %1939 = vmatprep.subr.mxu0 %v1908
    %1940 = vmatpush1.msra.mxu0 %v1907
    %1941 = vmatprep.subr.mxu0 %v1910
    %1942 = vmatpush1.msra.mxu0 %v1909
    %1943 = vmatprep.subr.mxu0 %v1912
    %1944 = vmatpush1.msra.mxu0 %v1911
    %1945 = vmatprep.subr.mxu0 %v1914
    %1946 = vmatpush1.msra.mxu0 %v1913
    %1947 = vmatprep.subr.mxu0 %v1916
    %1948 = vmatpush1.msra.mxu0 %v1915
    %1949 = vmatprep.subr.mxu0 %v1918
    %1950 = vmatpush1.msra.mxu0 %v1917
    %1951 = vmatprep.subr.mxu0 %v1920
    %1952 = vmatpush1.msra.mxu0 %v1919
    %1953 = vmatprep.subr.mxu0 0.0
    %1954 = vmatpush1.msra.mxu0 0.0
    %1955 = vmatprep.subr.mxu0 0.0
    %1956 = vmatpush1.msra.mxu0 0.0
    %1957 = vmatprep.subr.mxu0 0.0
    %1958 = vmatpush1.msra.mxu0 0.0
    %1959 = vmatprep.subr.mxu0 0.0
    %1960 = vmatpush1.msra.mxu0 0.0
    %1961 = vmatprep.subr.mxu0 0.0
    %1962 = vmatpush1.msra.mxu0 0.0
    %1963 = vmatprep.subr.mxu0 0.0
    %1964 = vmatpush1.msra.mxu0 0.0
    %1965 = vmatprep.subr.mxu0 0.0
    %1966 = vmatpush1.msra.mxu0 0.0
    %1967 = vmatprep.subr.mxu0 0.0
    %1968 = vmatpush1.msra.mxu0 0.0
    %1969 = vmatprep.subr.mxu0 0.0
    %1970 = vmatpush1.msra.mxu0 0.0
    %1971 = vmatprep.subr.mxu0 0.0
    %1972 = vmatpush1.msra.mxu0 0.0
    %1973 = vmatprep.subr.mxu0 0.0
    %1974 = vmatpush1.msra.mxu0 0.0
    %1975 = vmatprep.subr.mxu0 0.0
    %1976 = vmatpush1.msra.mxu0 0.0
    %1977 = vmatprep.subr.mxu0 0.0
    %1978 = vmatpush1.msra.mxu0 0.0
    %1979 = vmatprep.subr.mxu0 0.0
    %1980 = vmatpush1.msra.mxu0 0.0
    %1981 = vmatprep.subr.mxu0 0.0
    %1982 = vmatpush1.msra.mxu0 0.0
    %1983 = vmatprep.subr.mxu0 0.0
    %1984 = vmatpush1.msra.mxu0 0.0
    %1985 = vmatprep.mubr.f32.mxu0 0.0
    %1986 = vmatmul.mubr.f32.gmra.mrb[0].mxu0 %v1885
    %v1987 = vpop.f32.mrb[0].mxu0
    %v1988 = vadd.f32 0.0, %v1987
    %v1989 = vpop.f32.mrb[0].mxu0
    %v1990 = vadd.f32 0.0, %v1989
    %1991 = vdwg.mxu0
    %vm1992 = vcmask 48128
    %v1994 = vsel %vm1992, %v1886, 0
    %vm1996 = vcmask 1045504
    %v1998 = vsel %vm1996, %v1887, 0
    %v2001 = vsel %vm1996, %v1888, 0
    %2003 = vmatprep.subr.mxu0 %v2001
    %2004 = vmatpush1.msra.mxu0 %v1998
    %2005 = vmatprep.subr.mxu0 0.0
    %2006 = vmatpush1.msra.mxu0 0.0
    %2007 = vmatprep.subr.mxu0 0.0
    %2008 = vmatpush1.msra.mxu0 0.0
    %2009 = vmatprep.subr.mxu0 0.0
    %2010 = vmatpush1.msra.mxu0 0.0
    %2011 = vmatprep.subr.mxu0 0.0
    %2012 = vmatpush1.msra.mxu0 0.0
    %2013 = vmatprep.subr.mxu0 0.0
    %2014 = vmatpush1.msra.mxu0 0.0
    %2015 = vmatprep.subr.mxu0 0.0
    %2016 = vmatpush1.msra.mxu0 0.0
    %2017 = vmatprep.subr.mxu0 0.0
    %2018 = vmatpush1.msra.mxu0 0.0
    %2019 = vmatprep.subr.mxu0 0.0
    %2020 = vmatpush1.msra.mxu0 0.0
    %2021 = vmatprep.subr.mxu0 0.0
    %2022 = vmatpush1.msra.mxu0 0.0
    %2023 = vmatprep.subr.mxu0 0.0
    %2024 = vmatpush1.msra.mxu0 0.0
    %2025 = vmatprep.subr.mxu0 0.0
    %2026 = vmatpush1.msra.mxu0 0.0
    %2027 = vmatprep.subr.mxu0 0.0
    %2028 = vmatpush1.msra.mxu0 0.0
    %2029 = vmatprep.subr.mxu0 0.0
    %2030 = vmatpush1.msra.mxu0 0.0
    %2031 = vmatprep.subr.mxu0 0.0
    %2032 = vmatpush1.msra.mxu0 0.0
    %2033 = vmatprep.subr.mxu0 0.0
    %2034 = vmatpush1.msra.mxu0 0.0
    %2035 = vmatprep.subr.mxu0 0.0
    %2036 = vmatpush1.msra.mxu0 0.0
    %2037 = vmatprep.subr.mxu0 0.0
    %2038 = vmatpush1.msra.mxu0 0.0
    %2039 = vmatprep.subr.mxu0 0.0
    %2040 = vmatpush1.msra.mxu0 0.0
    %2041 = vmatprep.subr.mxu0 0.0
    %2042 = vmatpush1.msra.mxu0 0.0
    %2043 = vmatprep.subr.mxu0 0.0
    %2044 = vmatpush1.msra.mxu0 0.0
    %2045 = vmatprep.subr.mxu0 0.0
    %2046 = vmatpush1.msra.mxu0 0.0
    %2047 = vmatprep.subr.mxu0 0.0
    %2048 = vmatpush1.msra.mxu0 0.0
    %2049 = vmatprep.subr.mxu0 0.0
    %2050 = vmatpush1.msra.mxu0 0.0
    %2051 = vmatprep.subr.mxu0 0.0
    %2052 = vmatpush1.msra.mxu0 0.0
    %2053 = vmatprep.subr.mxu0 0.0
    %2054 = vmatpush1.msra.mxu0 0.0
    %2055 = vmatprep.subr.mxu0 0.0
    %2056 = vmatpush1.msra.mxu0 0.0
    %2057 = vmatprep.subr.mxu0 0.0
    %2058 = vmatpush1.msra.mxu0 0.0
    %2059 = vmatprep.subr.mxu0 0.0
    %2060 = vmatpush1.msra.mxu0 0.0
    %2061 = vmatprep.subr.mxu0 0.0
    %2062 = vmatpush1.msra.mxu0 0.0
    %2063 = vmatprep.subr.mxu0 0.0
    %2064 = vmatpush1.msra.mxu0 0.0
    %2065 = vmatprep.subr.mxu0 0.0
    %2066 = vmatpush1.msra.mxu0 0.0
    %2067 = vmatprep.mubr.f32.mxu0 0.0
    %2068 = vmatmul.mubr.f32.gmra.mrb[0].mxu0 %v1994
    %v2069 = vpop.f32.mrb[0].mxu0
    %v2070 = vadd.f32 %v1988, %v2069
    %v2071 = vpop.f32.mrb[0].mxu0
    %v2072 = vadd.f32 %v1990, %v2071
    %2073 = vdwg.mxu0
    %v2074 = vld [vmem:[%s7] sm:$0x3]
    %v2076 = vlaneseq
    %v2077 = vshrl.u32 %v2076, 7
    %v2078 = vsub.s32 0, %v2077
    %v2079 = vrot.slane %v2074, %v2078
    %v2080 = vlaneseq
    %v2081 = vshrl.u32 %v2080, 7
    %v2082 = vsub.s32 1, %v2081
    %v2083 = vrot.slane %v2074, %v2082
    %v2086 = vadd.f32 %v2070, %v2079
    %v2087 = vadd.f32 %v2072, %v2083
    %v2088 = vmax.f32 %v2086, 0.0
    %v2089 = vmax.f32 %v2087, 0.0
    %v2090 = vld [vmem:[#allocation8] sm:$0xff]
    %v2091 = vld [vmem:[#allocation8 + $0x8] sm:$0xff]
    %v2092 = vld [vmem:[#allocation8 + $0x10] sm:$0xff]
    %v2093 = vld [vmem:[#allocation8 + $0x18] sm:$0xff]
    %v2094 = vld [vmem:[#allocation8 + $0x20] sm:$0xff]
    %v2095 = vld [vmem:[#allocation8 + $0x28] sm:$0xff]
    %v2096 = vld [vmem:[#allocation8 + $0x30] sm:$0xff]
    %v2097 = vld [vmem:[#allocation8 + $0x38] sm:$0xff]
    %v2098 = vld [vmem:[#allocation8 + $0x40] sm:$0xff]
    %v2099 = vld [vmem:[#allocation8 + $0x48] sm:$0xff]
    %v2100 = vld [vmem:[#allocation8 + $0x50] sm:$0xff]
    %v2101 = vld [vmem:[#allocation8 + $0x58] sm:$0xff]
    %v2102 = vld [vmem:[#allocation8 + $0x60] sm:$0xff]
    %v2103 = vld [vmem:[#allocation8 + $0x68] sm:$0xff]
    %v2104 = vld [vmem:[#allocation8 + $0x70] sm:$0xff]
    %v2105 = vld [vmem:[#allocation8 + $0x78] sm:$0xff]
    %v2106 = vld [vmem:[#allocation8 + $0x80] sm:$0xff]
    %v2107 = vld [vmem:[#allocation8 + $0x88] sm:$0xff]
    %v2108 = vld [vmem:[#allocation8 + $0x90] sm:$0xff]
    %v2109 = vld [vmem:[#allocation8 + $0x98] sm:$0xff]
    %v2110 = vld [vmem:[#allocation8 + $0xa0] sm:$0xff]
    %v2111 = vld [vmem:[#allocation8 + $0xa8] sm:$0xff]
    %v2112 = vld [vmem:[#allocation8 + $0xb0] sm:$0xff]
    %v2113 = vld [vmem:[#allocation8 + $0xb8] sm:$0xff]
    %v2114 = vld [vmem:[#allocation8 + $0xc0] sm:$0xff]
    %v2115 = vld [vmem:[#allocation8 + $0xc8] sm:$0xff]
    %v2116 = vld [vmem:[#allocation8 + $0xd0] sm:$0xff]
    %v2117 = vld [vmem:[#allocation8 + $0xd8] sm:$0xff]
    %v2118 = vld [vmem:[#allocation8 + $0xe0] sm:$0xff]
    %v2119 = vld [vmem:[#allocation8 + $0xe8] sm:$0xff]
    %v2120 = vld [vmem:[#allocation8 + $0xf0] sm:$0xff]
    %v2121 = vld [vmem:[#allocation8 + $0xf8] sm:$0xff]
    %v2122 = vld [vmem:[%s9] sm:$0x1]
    %v2124 = vlaneseq
    %v2125 = vshrl.u32 %v2124, 7
    %v2126 = vsub.s32 0, %v2125
    %v2127 = vrot.slane %v2122, %v2126
    %2129 = vmatprep.subr.mxu0 0.0
    %2130 = vmatpush1.msra.mxu0 %v2090
    %2131 = vmatprep.subr.mxu0 0.0
    %2132 = vmatpush1.msra.mxu0 %v2091
    %2133 = vmatprep.subr.mxu0 0.0
    %2134 = vmatpush1.msra.mxu0 %v2092
    %2135 = vmatprep.subr.mxu0 0.0
    %2136 = vmatpush1.msra.mxu0 %v2093
    %2137 = vmatprep.subr.mxu0 0.0
    %2138 = vmatpush1.msra.mxu0 %v2094
    %2139 = vmatprep.subr.mxu0 0.0
    %2140 = vmatpush1.msra.mxu0 %v2095
    %2141 = vmatprep.subr.mxu0 0.0
    %2142 = vmatpush1.msra.mxu0 %v2096
    %2143 = vmatprep.subr.mxu0 0.0
    %2144 = vmatpush1.msra.mxu0 %v2097
    %2145 = vmatprep.subr.mxu0 0.0
    %2146 = vmatpush1.msra.mxu0 %v2098
    %2147 = vmatprep.subr.mxu0 0.0
    %2148 = vmatpush1.msra.mxu0 %v2099
    %2149 = vmatprep.subr.mxu0 0.0
    %2150 = vmatpush1.msra.mxu0 %v2100
    %2151 = vmatprep.subr.mxu0 0.0
    %2152 = vmatpush1.msra.mxu0 %v2101
    %2153 = vmatprep.subr.mxu0 0.0
    %2154 = vmatpush1.msra.mxu0 %v2102
    %2155 = vmatprep.subr.mxu0 0.0
    %2156 = vmatpush1.msra.mxu0 %v2103
    %2157 = vmatprep.subr.mxu0 0.0
    %2158 = vmatpush1.msra.mxu0 %v2104
    %2159 = vmatprep.subr.mxu0 0.0
    %2160 = vmatpush1.msra.mxu0 %v2105
    %2161 = vmatprep.subr.mxu0 0.0
    %2162 = vmatpush1.msra.mxu0 %v2106
    %2163 = vmatprep.subr.mxu0 0.0
    %2164 = vmatpush1.msra.mxu0 %v2107
    %2165 = vmatprep.subr.mxu0 0.0
    %2166 = vmatpush1.msra.mxu0 %v2108
    %2167 = vmatprep.subr.mxu0 0.0
    %2168 = vmatpush1.msra.mxu0 %v2109
    %2169 = vmatprep.subr.mxu0 0.0
    %2170 = vmatpush1.msra.mxu0 %v2110
    %2171 = vmatprep.subr.mxu0 0.0
    %2172 = vmatpush1.msra.mxu0 %v2111
    %2173 = vmatprep.subr.mxu0 0.0
    %2174 = vmatpush1.msra.mxu0 %v2112
    %2175 = vmatprep.subr.mxu0 0.0
    %2176 = vmatpush1.msra.mxu0 %v2113
    %2177 = vmatprep.subr.mxu0 0.0
    %2178 = vmatpush1.msra.mxu0 %v2114
    %2179 = vmatprep.subr.mxu0 0.0
    %2180 = vmatpush1.msra.mxu0 %v2115
    %2181 = vmatprep.subr.mxu0 0.0
    %2182 = vmatpush1.msra.mxu0 %v2116
    %2183 = vmatprep.subr.mxu0 0.0
    %2184 = vmatpush1.msra.mxu0 %v2117
    %2185 = vmatprep.subr.mxu0 0.0
    %2186 = vmatpush1.msra.mxu0 %v2118
    %2187 = vmatprep.subr.mxu0 0.0
    %2188 = vmatpush1.msra.mxu0 %v2119
    %2189 = vmatprep.subr.mxu0 0.0
    %2190 = vmatpush1.msra.mxu0 %v2120
    %2191 = vmatprep.subr.mxu0 0.0
    %2192 = vmatpush1.msra.mxu0 %v2121
    %2193 = vmatprep.mubr.f32.mxu0 %v2089
    %2194 = vmatmul.mubr.f32.gmra.mrb[0].mxu0 %v2088
    %v2195 = vpop.f32.mrb[0].mxu0
    %v2196 = vadd.f32 %v2127, %v2195
    %v2197 = vpop.f32.mrb[0].mxu0
    %2198 = vdwg.mxu0
    %v2199 = vmax.f32 %v2196, 0.0
    %v2200 = vld [vmem:[%s10] sm:$0xff]
    %v2201 = vld [vmem:[%s10 + $0x8] sm:$0xff]
    %v2202 = vld [vmem:[%s10 + $0x10] sm:$0xff]
    %v2203 = vld [vmem:[%s10 + $0x18] sm:$0xff]
    %v2204 = vld [vmem:[%s10 + $0x20] sm:$0xff]
    %v2205 = vld [vmem:[%s10 + $0x28] sm:$0xff]
    %v2206 = vld [vmem:[%s10 + $0x30] sm:$0xff]
    %v2207 = vld [vmem:[%s10 + $0x38] sm:$0xff]
    %v2208 = vld [vmem:[%s10 + $0x40] sm:$0xff]
    %v2209 = vld [vmem:[%s10 + $0x48] sm:$0xff]
    %v2210 = vld [vmem:[%s10 + $0x50] sm:$0xff]
    %v2211 = vld [vmem:[%s10 + $0x58] sm:$0xff]
    %v2212 = vld [vmem:[%s10 + $0x60] sm:$0xff]
    %v2213 = vld [vmem:[%s10 + $0x68] sm:$0xff]
    %v2214 = vld [vmem:[%s10 + $0x70] sm:$0xff]
    %v2215 = vld [vmem:[%s10 + $0x78] sm:$0xff]
    %v2216 = vld [vmem:[%s11] sm:$0x1]
    %v2218 = vlaneseq
    %v2219 = vshrl.u32 %v2218, 7
    %v2220 = vsub.s32 0, %v2219
    %v2221 = vrot.slane %v2216, %v2220
    %2223 = vmatprep.subr.mxu0 0.0
    %2224 = vmatpush1.msra.mxu0 %v2200
    %2225 = vmatprep.subr.mxu0 0.0
    %2226 = vmatpush1.msra.mxu0 %v2201
    %2227 = vmatprep.subr.mxu0 0.0
    %2228 = vmatpush1.msra.mxu0 %v2202
    %2229 = vmatprep.subr.mxu0 0.0
    %2230 = vmatpush1.msra.mxu0 %v2203
    %2231 = vmatprep.subr.mxu0 0.0
    %2232 = vmatpush1.msra.mxu0 %v2204
    %2233 = vmatprep.subr.mxu0 0.0
    %2234 = vmatpush1.msra.mxu0 %v2205
    %2235 = vmatprep.subr.mxu0 0.0
    %2236 = vmatpush1.msra.mxu0 %v2206
    %2237 = vmatprep.subr.mxu0 0.0
    %2238 = vmatpush1.msra.mxu0 %v2207
    %2239 = vmatprep.subr.mxu0 0.0
    %2240 = vmatpush1.msra.mxu0 %v2208
    %2241 = vmatprep.subr.mxu0 0.0
    %2242 = vmatpush1.msra.mxu0 %v2209
    %2243 = vmatprep.subr.mxu0 0.0
    %2244 = vmatpush1.msra.mxu0 %v2210
    %2245 = vmatprep.subr.mxu0 0.0
    %2246 = vmatpush1.msra.mxu0 %v2211
    %2247 = vmatprep.subr.mxu0 0.0
    %2248 = vmatpush1.msra.mxu0 %v2212
    %2249 = vmatprep.subr.mxu0 0.0
    %2250 = vmatpush1.msra.mxu0 %v2213
    %2251 = vmatprep.subr.mxu0 0.0
    %2252 = vmatpush1.msra.mxu0 %v2214
    %2253 = vmatprep.subr.mxu0 0.0
    %2254 = vmatpush1.msra.mxu0 %v2215
    %2255 = vmatprep.subr.mxu0 0.0
    %2256 = vmatpush1.msra.mxu0 0.0
    %2257 = vmatprep.subr.mxu0 0.0
    %2258 = vmatpush1.msra.mxu0 0.0
    %2259 = vmatprep.subr.mxu0 0.0
    %2260 = vmatpush1.msra.mxu0 0.0
    %2261 = vmatprep.subr.mxu0 0.0
    %2262 = vmatpush1.msra.mxu0 0.0
    %2263 = vmatprep.subr.mxu0 0.0
    %2264 = vmatpush1.msra.mxu0 0.0
    %2265 = vmatprep.subr.mxu0 0.0
    %2266 = vmatpush1.msra.mxu0 0.0
    %2267 = vmatprep.subr.mxu0 0.0
    %2268 = vmatpush1.msra.mxu0 0.0
    %2269 = vmatprep.subr.mxu0 0.0
    %2270 = vmatpush1.msra.mxu0 0.0
    %2271 = vmatprep.subr.mxu0 0.0
    %2272 = vmatpush1.msra.mxu0 0.0
    %2273 = vmatprep.subr.mxu0 0.0
    %2274 = vmatpush1.msra.mxu0 0.0
    %2275 = vmatprep.subr.mxu0 0.0
    %2276 = vmatpush1.msra.mxu0 0.0
    %2277 = vmatprep.subr.mxu0 0.0
    %2278 = vmatpush1.msra.mxu0 0.0
    %2279 = vmatprep.subr.mxu0 0.0
    %2280 = vmatpush1.msra.mxu0 0.0
    %2281 = vmatprep.subr.mxu0 0.0
    %2282 = vmatpush1.msra.mxu0 0.0
    %2283 = vmatprep.subr.mxu0 0.0
    %2284 = vmatpush1.msra.mxu0 0.0
    %2285 = vmatprep.subr.mxu0 0.0
    %2286 = vmatpush1.msra.mxu0 0.0
    %2287 = vmatprep.mubr.f32.mxu0 0.0
    %2288 = vmatmul.mubr.f32.gmra.mrb[0].mxu0 %v2199
    %v2289 = vpop.f32.mrb[0].mxu0
    %v2290 = vadd.f32 %v2221, %v2289
    %v2291 = vpop.f32.mrb[0].mxu0
    %2292 = vdwg.mxu0
    %2293 = vst [vmem:[%s12] sm:$0xff] %v2290
    // Predicated region
    $region66: #{network_forward.1} parent=1 // pred_check
      _
    $region67: #{network_forward.1} parent=1 // pred_check_branch
      %2295 = sbr.rel (0) target = $region69
    $region68: #{network_forward.1} parent=1 // pred_region
      _
    $region69: #{network_forward.1} parent=1 // pred_fallthru
      _
    // Predicated region
    $region70: #{network_forward.1} parent=1 // pred_check
      _
    $region71: #{network_forward.1} parent=1 // pred_check_branch
      %2297 = sbr.rel (0) target = $region73
    $region72: #{network_forward.1} parent=1 // pred_region
      _
    $region73: #{network_forward.1} parent=1 // pred_fallthru
      _
    %2298 = vsyncpa [#allocation4], 1
    %2299 = vsyncpa [#allocation6], 1
    %2300 = vsyncpa [#allocation9], 1

</llo_original>
